<compile_context>
chip_gen: v6e
topology: v6e:2x2x1
jax: 0.10.0
libtpu: 0.0.40
codegen_flags: <defaults>
</compile_context>

<pallas_src>
import functools

import jax
import jax.numpy as jnp
from jax.experimental import pallas as pl
from jax.experimental.pallas import tpu as pltpu

LANE_PAD = 128  # pad every feature/hidden/label dim to a full 128-lane vreg


# ----------------------------------------------------------------------------
# Fused Pallas kernel: all GC layers + final linear, BG graphs per grid step
# ----------------------------------------------------------------------------
def _gcn_fused_kernel(x_ref, adjs_ref, ws_ref, bs_ref, w_out_ref, b_out_ref,
                      o_ref):
    # x_ref:     (BG, N, FP)    f32  padded node features for BG graphs
    # adjs_ref:  (L, BG, N, N)  bf16 per-layer, per-graph adjacency
    # ws_ref:    (L, FP, FP)    bf16 zero-padded GC weights
    # bs_ref:    (L, 1, FP)     f32  zero-padded GC biases
    # w_out_ref: (FP, FP)       bf16 zero-padded final linear weight (in, out)
    # b_out_ref: (1, FP)        f32  zero-padded final linear bias
    # o_ref:     (BG, N, FP)    f32  lane-dense padded output
    bg, n, fp = x_ref.shape
    num_layers = ws_ref.shape[0]
    flat_ok = (n % 8) == 0  # (BG,N,FP)<->(BG*N,FP) reshape stays tile-aligned

    h = x_ref[...]                                   # f32
    for ell in range(num_layers):                    # static unroll; L is tiny
        # Feature transform h @ W: fold (BG, N) into the MXU M dimension.
        if flat_ok:
            support = jnp.dot(h.reshape(bg * n, fp).astype(jnp.bfloat16),
                              ws_ref[ell],
                              preferred_element_type=jnp.float32
                              ).reshape(bg, n, fp)
        else:
            support = jnp.einsum('bnf,fg->bng', h.astype(jnp.bfloat16),
                                 ws_ref[ell],
                                 preferred_element_type=jnp.float32)
        # Per-graph aggregation adj @ support (batched over the BG graphs).
        agg = jnp.einsum('bij,bjf->bif', adjs_ref[ell],
                         support.astype(jnp.bfloat16),
                         preferred_element_type=jnp.float32)
        # Bias + ReLU epilogue in f32; dropout is identity (eval mode).
        h = jnp.maximum(agg + bs_ref[ell], 0.0)

    if flat_ok:
        y = jnp.dot(h.reshape(bg * n, fp).astype(jnp.bfloat16),
                    w_out_ref[...],
                    preferred_element_type=jnp.float32).reshape(bg, n, fp)
    else:
        y = jnp.einsum('bnf,fg->bng', h.astype(jnp.bfloat16), w_out_ref[...],
                       preferred_element_type=jnp.float32)
    o_ref[...] = (y + b_out_ref[...]).astype(o_ref.dtype)


# ----------------------------------------------------------------------------
# Host side: one-time parameter preparation (padding hoisted out of forward)
# ----------------------------------------------------------------------------
def _pad2d(a, rows, cols):
    out = jnp.zeros((rows, cols), jnp.float32)
    return out.at[:a.shape[0], :a.shape[1]].set(a)


def prepare_params(gc_weights, gc_biases, w_out, b_out, fp=LANE_PAD):
    """Zero-pad every feature dim to 128 lanes and stack; call ONCE at init."""
    dims = [d for w in gc_weights for d in w.shape] + list(w_out.shape)
    assert max(dims) <= fp, "feature/hidden/label dims must be <= LANE_PAD"
    ws_p = jnp.stack([_pad2d(w, fp, fp) for w in gc_weights]).astype(jnp.bfloat16)
    bs_p = jnp.stack([_pad2d(b, 1, fp) for b in gc_biases])            # f32
    w_out_p = _pad2d(w_out, fp, fp).astype(jnp.bfloat16)
    b_out_p = _pad2d(b_out, 1, fp)                                     # f32
    return ws_p, bs_p, w_out_p, b_out_p


# ----------------------------------------------------------------------------
# Jitted forward: pad x, single pallas_call over a parallel batch grid, slice
# ----------------------------------------------------------------------------
@functools.partial(jax.jit, static_argnames=("label",))
def gcn_first_forward(x, adjs, ws_p, bs_p, w_out_p, b_out_p, *, label):
    """x: (B, N, F0) f32; adjs: (B, L, N, N) f32 row-normalized adjacency;
    ws_p/bs_p/w_out_p/b_out_p from prepare_params(). Returns (B, N, label)."""
    b, n, f0 = x.shape
    num_layers, _, fp = ws_p.shape

    # Lane-dense zero padding of the features; padded lanes stay exactly zero
    # through every layer (zero-padded weights/biases, relu(0)=0).
    x_p = jnp.zeros((b, n, fp), jnp.float32).at[:, :, :f0].set(x)
    # Layer-major bf16 adjacency so the kernel indexes adjs_ref[layer].
    adjs_t = jnp.transpose(adjs, (1, 0, 2, 3)).astype(jnp.bfloat16)

    # Graphs per grid step: fill a 128-row MXU pass while dividing B evenly.
    bg = max(1, min(b, LANE_PAD // max(n, 1)))
    while b % bg:
        bg -= 1
    grid = (b // bg,)

    flops = b * (2 * num_layers * (n * fp * fp + n * n * fp) + 2 * n * fp * fp)
    bytes_accessed = (x_p.size * 4 + adjs_t.size * 2 + ws_p.size * 2 +
                      bs_p.size * 4 + w_out_p.size * 2 + b_out_p.size * 4 +
                      b * n * fp * 4)

    grid_spec = pltpu.PrefetchScalarGridSpec(
        num_scalar_prefetch=0,
        grid=grid,
        in_specs=[
            pl.BlockSpec((bg, n, fp), lambda i: (i, 0, 0)),
            pl.BlockSpec((num_layers, bg, n, n), lambda i: (0, i, 0, 0)),
            pl.BlockSpec((num_layers, fp, fp), lambda i: (0, 0, 0)),
            pl.BlockSpec((num_layers, 1, fp), lambda i: (0, 0, 0)),
            pl.BlockSpec((fp, fp), lambda i: (0, 0)),
            pl.BlockSpec((1, fp), lambda i: (0, 0)),
        ],
        out_specs=pl.BlockSpec((bg, n, fp), lambda i: (i, 0, 0)),
    )

    out_p = pl.pallas_call(
        _gcn_fused_kernel,
        out_shape=jax.ShapeDtypeStruct((b, n, fp), jnp.float32),
        grid_spec=grid_spec,
        compiler_params=pltpu.CompilerParams(
            dimension_semantics=("parallel",),     # both v7x TensorCores work
            vmem_limit_bytes=32 * 1024 * 1024),    # within v7x's 64 MiB budget
        cost_estimate=pl.CostEstimate(flops=flops, transcendentals=0,
                                      bytes_accessed=bytes_accessed),
    )(x_p, adjs_t, ws_p, bs_p, w_out_p, b_out_p)
    return out_p[:, :, :label]


# ----------------------------------------------------------------------------
# Deterministic parameter init (Glorot-ish, matches GraphConvolution/Linear)
# ----------------------------------------------------------------------------
def init_params(key, layer_size):
    """layer_size = [feature, hidden..., label]."""
    gc_weights, gc_biases = [], []
    k = key
    for i in range(len(layer_size) - 2):
        k, k1, k2 = jax.random.split(k, 3)
        f_in, f_out = layer_size[i], layer_size[i + 1]
        scale = 1.0 / jnp.sqrt(f_in)
        gc_weights.append(jax.random.uniform(k1, (f_in, f_out), jnp.float32,
                                             -scale, scale))
        gc_biases.append(jax.random.uniform(k2, (1, f_out), jnp.float32,
                                            -scale, scale))
    k, k1, k2 = jax.random.split(k, 3)
    f_in, f_out = layer_size[-2], layer_size[-1]
    scale = 1.0 / jnp.sqrt(f_in)
    # nn.Linear stores (out, in); keep it pre-transposed as (in, out).
    w_out = jax.random.uniform(k1, (f_in, f_out), jnp.float32, -scale, scale)
    b_out = jax.random.uniform(k2, (1, f_out), jnp.float32, -scale, scale)
    return gc_weights, gc_biases, w_out, b_out


if __name__ == "__main__":
    # layer_size = [feature, hidden, hidden, label] -> 2 GraphConvolution + Linear
    layer_size = [16, 32, 32, 4]
    num_gc = len(layer_size) - 2
    B, N = 32, 8  # 32 graphs x 8 nodes; kernel packs 16 graphs per grid step

    key = jax.random.PRNGKey(0)
    key, kx, ka = jax.random.split(key, 3)

    x = jax.random.normal(kx, (B, N, layer_size[0]), jnp.float32)

    # Symmetric, row-normalized adjacency per (graph, layer) with self-loops.
    a = jax.random.uniform(ka, (B, num_gc, N, N), jnp.float32)
    a = (a + jnp.swapaxes(a, -1, -2)) * 0.5 + jnp.eye(N)
    adjs = a / jnp.sum(a, axis=-1, keepdims=True)

    gc_weights, gc_biases, w_out, b_out = init_params(key, layer_size)
    params = prepare_params(gc_weights, gc_biases, w_out, b_out)  # hoisted

    out = gcn_first_forward(x, adjs, *params, label=layer_size[-1])
    out = jax.block_until_ready(out)
    assert out.shape == (B, N, layer_size[-1])

    # Reference #1: identical math with the same bf16 operand rounding (tight).
    bf16 = jnp.bfloat16
    h = x
    for ell in range(num_gc):
        sup = jnp.einsum('bnf,fg->bng', h.astype(bf16),
                         gc_weights[ell].astype(bf16),
                         preferred_element_type=jnp.float32)
        agg = jnp.einsum('bij,bjf->bif', adjs[:, ell].astype(bf16),
                         sup.astype(bf16),
                         preferred_element_type=jnp.float32)
        h = jnp.maximum(agg + gc_biases[ell], 0.0)
    ref_bf16 = jnp.einsum('bng,gl->bnl', h.astype(bf16), w_out.astype(bf16),
                          preferred_element_type=jnp.float32) + b_out

    # Reference #2: full f32 math (loose bound on bf16 rounding error).
    h32 = x
    for ell in range(num_gc):
        h32 = jnp.maximum(
            jnp.einsum('bij,bjf,fg->big', adjs[:, ell], h32, gc_weights[ell])
            + gc_biases[ell], 0.0)
    ref_f32 = h32 @ w_out + b_out

    assert jnp.allclose(out, ref_bf16, atol=2e-3, rtol=2e-3)
    assert jnp.allclose(out, ref_f32, atol=1e-1, rtol=1e-1)

    # TODO(synk): training-mode dropout would use pltpu.prng_seed +
    # pltpu.prng_random_bits for an in-kernel mask; omitted (eval mode).
    print("KERNEL_OK")
</pallas_src>

<mosaic_0001>
module attributes {stable_mosaic.version = 11 : i64} {
  func.func @_gcn_fused_kernel(%arg0: i32, %arg1: memref<16x8x128xf32, #tpu.memory_space<vmem>>, %arg2: memref<2x16x8x8xbf16, #tpu.memory_space<vmem>>, %arg3: memref<2x128x128xbf16, #tpu.memory_space<vmem>>, %arg4: memref<2x1x128xf32, #tpu.memory_space<vmem>>, %arg5: memref<128x128xbf16, #tpu.memory_space<vmem>>, %arg6: memref<1x128xf32, #tpu.memory_space<vmem>>, %arg7: memref<16x8x128xf32, #tpu.memory_space<vmem>>) attributes {dimension_semantics = [#tpu.dimension_semantics<parallel>], iteration_bounds = array<i64: 2>, scalar_prefetch = 0 : i64, scratch_operands = 0 : i64, tpu.core_type = #tpu.core_type<tc>, window_params = [{transform_indices = @transform_0, window_bounds = array<i64: 16, 8, 128>}, {transform_indices = @transform_1, window_bounds = array<i64: 2, 16, 8, 8>}, {pipeline_mode = #tpu.pipeline_mode<synchronous>, transform_indices = @transform_2, window_bounds = array<i64: 2, 128, 128>}, {pipeline_mode = #tpu.pipeline_mode<synchronous>, transform_indices = @transform_3, window_bounds = array<i64: 2, 1, 128>}, {pipeline_mode = #tpu.pipeline_mode<synchronous>, transform_indices = @transform_4, window_bounds = array<i64: 128, 128>}, {pipeline_mode = #tpu.pipeline_mode<synchronous>, transform_indices = @transform_5, window_bounds = array<i64: 1, 128>}, {transform_indices = @transform_6, window_bounds = array<i64: 16, 8, 128>}]} {
    %c0 = arith.constant 0 : index
    %c0_0 = arith.constant 0 : index
    %c0_1 = arith.constant 0 : index
    %0 = vector.load %arg1[%c0, %c0_0, %c0_1] : memref<16x8x128xf32, #tpu.memory_space<vmem>>, vector<16x8x128xf32>
    %1 = vector.shape_cast %0 : vector<16x8x128xf32> to vector<128x128xf32>
    %2 = arith.truncf %1 : vector<128x128xf32> to vector<128x128xbf16>
    %c0_2 = arith.constant 0 : index
    %c0_3 = arith.constant 0 : index
    %c0_4 = arith.constant 0 : index
    %3 = vector.load %arg3[%c0_2, %c0_3, %c0_4] : memref<2x128x128xbf16, #tpu.memory_space<vmem>>, vector<1x128x128xbf16>
    %4 = vector.shape_cast %3 : vector<1x128x128xbf16> to vector<128x128xbf16>
    %cst = arith.constant dense<0.000000e+00> : vector<128x128xf32>
    %5 = tpu.matmul %2, %4, %cst {dimension_numbers = #tpu.dot_dimension_numbers<[1], [0], [0], [1], [0, 0, 1, 1], [], []>} : vector<128x128xbf16>, vector<128x128xbf16>, vector<128x128xf32> -> vector<128x128xf32>
    %6 = vector.shape_cast %5 : vector<128x128xf32> to vector<16x8x128xf32>
    %c0_5 = arith.constant 0 : index
    %c0_6 = arith.constant 0 : index
    %c0_7 = arith.constant 0 : index
    %c0_8 = arith.constant 0 : index
    %7 = vector.load %arg2[%c0_5, %c0_6, %c0_7, %c0_8] : memref<2x16x8x8xbf16, #tpu.memory_space<vmem>>, vector<1x16x8x8xbf16>
    %8 = vector.shape_cast %7 : vector<1x16x8x8xbf16> to vector<16x8x8xbf16>
    %9 = arith.truncf %6 : vector<16x8x128xf32> to vector<16x8x128xbf16>
    "tpu.trace_start"() <{level = 10 : i32, message = "bij,bjf->bif"}> : () -> ()
    %cst_9 = arith.constant dense<0.000000e+00> : vector<16x8x128xf32>
    %10 = tpu.matmul %8, %9, %cst_9 {dimension_numbers = #tpu.dot_dimension_numbers<[2], [1], [1], [2], [0, 0, 0, 1, 1, 2], [0], [0]>} : vector<16x8x8xbf16>, vector<16x8x128xbf16>, vector<16x8x128xf32> -> vector<16x8x128xf32>
    "tpu.trace_stop"() : () -> ()
    %c0_10 = arith.constant 0 : index
    %c0_11 = arith.constant 0 : index
    %c0_12 = arith.constant 0 : index
    %11 = vector.load %arg4[%c0_10, %c0_11, %c0_12] : memref<2x1x128xf32, #tpu.memory_space<vmem>>, vector<1x1x128xf32>
    %12 = vector.shape_cast %11 : vector<1x1x128xf32> to vector<1x128xf32>
    %13 = vector.shape_cast %12 : vector<1x128xf32> to vector<1x1x128xf32>
    %14 = vector.broadcast %13 : vector<1x1x128xf32> to vector<16x8x128xf32>
    %15 = arith.addf %10, %14 : vector<16x8x128xf32>
    %cst_13 = arith.constant 0.000000e+00 : f32
    %16 = vector.broadcast %cst_13 : f32 to vector<16x8x128xf32>
    %17 = arith.maximumf %15, %16 : vector<16x8x128xf32>
    %18 = vector.shape_cast %17 : vector<16x8x128xf32> to vector<128x128xf32>
    %19 = arith.truncf %18 : vector<128x128xf32> to vector<128x128xbf16>
    %c1 = arith.constant 1 : index
    %c0_14 = arith.constant 0 : index
    %c0_15 = arith.constant 0 : index
    %20 = vector.load %arg3[%c1, %c0_14, %c0_15] : memref<2x128x128xbf16, #tpu.memory_space<vmem>>, vector<1x128x128xbf16>
    %21 = vector.shape_cast %20 : vector<1x128x128xbf16> to vector<128x128xbf16>
    %cst_16 = arith.constant dense<0.000000e+00> : vector<128x128xf32>
    %22 = tpu.matmul %19, %21, %cst_16 {dimension_numbers = #tpu.dot_dimension_numbers<[1], [0], [0], [1], [0, 0, 1, 1], [], []>} : vector<128x128xbf16>, vector<128x128xbf16>, vector<128x128xf32> -> vector<128x128xf32>
    %23 = vector.shape_cast %22 : vector<128x128xf32> to vector<16x8x128xf32>
    %c1_17 = arith.constant 1 : index
    %c0_18 = arith.constant 0 : index
    %c0_19 = arith.constant 0 : index
    %c0_20 = arith.constant 0 : index
    %24 = vector.load %arg2[%c1_17, %c0_18, %c0_19, %c0_20] : memref<2x16x8x8xbf16, #tpu.memory_space<vmem>>, vector<1x16x8x8xbf16>
    %25 = vector.shape_cast %24 : vector<1x16x8x8xbf16> to vector<16x8x8xbf16>
    %26 = arith.truncf %23 : vector<16x8x128xf32> to vector<16x8x128xbf16>
    "tpu.trace_start"() <{level = 10 : i32, message = "bij,bjf->bif"}> : () -> ()
    %cst_21 = arith.constant dense<0.000000e+00> : vector<16x8x128xf32>
    %27 = tpu.matmul %25, %26, %cst_21 {dimension_numbers = #tpu.dot_dimension_numbers<[2], [1], [1], [2], [0, 0, 0, 1, 1, 2], [0], [0]>} : vector<16x8x8xbf16>, vector<16x8x128xbf16>, vector<16x8x128xf32> -> vector<16x8x128xf32>
    "tpu.trace_stop"() : () -> ()
    %c1_22 = arith.constant 1 : index
    %c0_23 = arith.constant 0 : index
    %c0_24 = arith.constant 0 : index
    %28 = vector.load %arg4[%c1_22, %c0_23, %c0_24] : memref<2x1x128xf32, #tpu.memory_space<vmem>>, vector<1x1x128xf32>
    %29 = vector.shape_cast %28 : vector<1x1x128xf32> to vector<1x128xf32>
    %30 = vector.shape_cast %29 : vector<1x128xf32> to vector<1x1x128xf32>
    %31 = vector.broadcast %30 : vector<1x1x128xf32> to vector<16x8x128xf32>
    %32 = arith.addf %27, %31 : vector<16x8x128xf32>
    %cst_25 = arith.constant 0.000000e+00 : f32
    %33 = vector.broadcast %cst_25 : f32 to vector<16x8x128xf32>
    %34 = arith.maximumf %32, %33 : vector<16x8x128xf32>
    %35 = vector.shape_cast %34 : vector<16x8x128xf32> to vector<128x128xf32>
    %36 = arith.truncf %35 : vector<128x128xf32> to vector<128x128xbf16>
    %c0_26 = arith.constant 0 : index
    %c0_27 = arith.constant 0 : index
    %37 = vector.load %arg5[%c0_26, %c0_27] : memref<128x128xbf16, #tpu.memory_space<vmem>>, vector<128x128xbf16>
    %cst_28 = arith.constant dense<0.000000e+00> : vector<128x128xf32>
    %38 = tpu.matmul %36, %37, %cst_28 {dimension_numbers = #tpu.dot_dimension_numbers<[1], [0], [0], [1], [0, 0, 1, 1], [], []>} : vector<128x128xbf16>, vector<128x128xbf16>, vector<128x128xf32> -> vector<128x128xf32>
    %39 = vector.shape_cast %38 : vector<128x128xf32> to vector<16x8x128xf32>
    %c0_29 = arith.constant 0 : index
    %c0_30 = arith.constant 0 : index
    %40 = vector.load %arg6[%c0_29, %c0_30] : memref<1x128xf32, #tpu.memory_space<vmem>>, vector<1x128xf32>
    %41 = vector.shape_cast %40 : vector<1x128xf32> to vector<1x1x128xf32>
    %42 = vector.broadcast %41 : vector<1x1x128xf32> to vector<16x8x128xf32>
    %43 = arith.addf %39, %42 : vector<16x8x128xf32>
    %c0_31 = arith.constant 0 : index
    %c0_32 = arith.constant 0 : index
    %c0_33 = arith.constant 0 : index
    %44 = vector.load %arg7[%c0_31, %c0_32, %c0_33] : memref<16x8x128xf32, #tpu.memory_space<vmem>>, vector<16x8x128xf32>
    tpu.vector_store %arg7[%c0_31, %c0_32, %c0_33], %43 {strides = array<i32>} : memref<16x8x128xf32, #tpu.memory_space<vmem>>, vector<16x8x128xf32>,
    return
  }
  func.func @transform_0(%arg0: i32) -> (i32, i32, i32) {
    %c0_i32 = arith.constant 0 : i32
    %c0_i32_0 = arith.constant 0 : i32
    %c0_i32_1 = arith.constant 0 : i32
    return %arg0, %c0_i32, %c0_i32_0 : i32, i32, i32
  }
  func.func @transform_1(%arg0: i32) -> (i32, i32, i32, i32) {
    %c0_i32 = arith.constant 0 : i32
    %c0_i32_0 = arith.constant 0 : i32
    %c0_i32_1 = arith.constant 0 : i32
    %c0_i32_2 = arith.constant 0 : i32
    return %c0_i32, %arg0, %c0_i32_0, %c0_i32_1 : i32, i32, i32, i32
  }
  func.func @transform_2(%arg0: i32) -> (i32, i32, i32) {
    %c0_i32 = arith.constant 0 : i32
    %c0_i32_0 = arith.constant 0 : i32
    %c0_i32_1 = arith.constant 0 : i32
    %c0_i32_2 = arith.constant 0 : i32
    return %c0_i32, %c0_i32_0, %c0_i32_1 : i32, i32, i32
  }
  func.func @transform_3(%arg0: i32) -> (i32, i32, i32) {
    %c0_i32 = arith.constant 0 : i32
    %c0_i32_0 = arith.constant 0 : i32
    %c0_i32_1 = arith.constant 0 : i32
    %c0_i32_2 = arith.constant 0 : i32
    return %c0_i32, %c0_i32_0, %c0_i32_1 : i32, i32, i32
  }
  func.func @transform_4(%arg0: i32) -> (i32, i32) {
    %c0_i32 = arith.constant 0 : i32
    %c0_i32_0 = arith.constant 0 : i32
    %c0_i32_1 = arith.constant 0 : i32
    return %c0_i32, %c0_i32_0 : i32, i32
  }
  func.func @transform_5(%arg0: i32) -> (i32, i32) {
    %c0_i32 = arith.constant 0 : i32
    %c0_i32_0 = arith.constant 0 : i32
    %c0_i32_1 = arith.constant 0 : i32
    return %c0_i32, %c0_i32_0 : i32, i32
  }
  func.func @transform_6(%arg0: i32) -> (i32, i32, i32) {
    %c0_i32 = arith.constant 0 : i32
    %c0_i32_0 = arith.constant 0 : i32
    %c0_i32_1 = arith.constant 0 : i32
    return %arg0, %c0_i32, %c0_i32_0 : i32, i32, i32
  }
}

</mosaic_0001>

<llo_original>
// kernel: gcn_first_forward.1
$region0: #{gcn_first_forward.1}
  #allocation0 [shape = 'u32[]', space=smem, size = 0x4, offset = 0x4, fixed_abs, tag = 'smem constant byte address 0x4 - core index']
  #allocation1 [shape = 'u32[144,128]{1,0:T(1,128)}', space=vmem, size = 0x12000, scoped, tag = 'internal scratch']
  %s0 = inlined_call_operand.vmem [shape: f32[32,8,128], index: 0, kind: input, shape index: {}]
  %s1 = inlined_call_operand.vmem [shape: bf16[2,32,8,8], index: 1, kind: input, shape index: {}]
  %s2 = inlined_call_operand.vmem [shape: bf16[2,128,128], index: 2, kind: input, shape index: {}]
  %s3 = inlined_call_operand.vmem [shape: f32[2,1,128], index: 3, kind: input, shape index: {}]
  %s4 = inlined_call_operand.vmem [shape: bf16[128,128], index: 4, kind: input, shape index: {}]
  %s5 = inlined_call_operand.vmem [shape: f32[1,128], index: 5, kind: input, shape index: {}]
  %s6 = inlined_call_operand.vmem [shape: f32[32,8,128], index: 6, kind: output, shape index: {}]
  %s7 = sld [smem:[#allocation0]]
  $region98: #{gcn_first_forward.1} parent=0
    _
  %s9 = ssub.s32 1, %s7
  %s10 = scalar_select 0, %s9, %s7
  $region1: #{gcn_first_forward.1} parent=0
    #allocation2 [shape = 'u8[131072]{0}', space=vmem, size = 0x20000, scoped, tag = 'input window, operand 1']
    loop: start=0, step=1, limit=4
    $region2: #{gcn_first_forward.1} parent=1 // loop_pre_header
      _
    $region3: #{gcn_first_forward.1} parent=1 // loop_header
      %s12 = sphi 0, %s16
      %p13 = scmp.ge.s32.totalorder %s12, 4
      %s22 = sphi 0, %s24
      %s25 = sphi 0, %s22
      %s26 = sphi 0, %s25
      %s42 = sphi 0, %s26
      %s48 = sphi 0, %s50
      %s51 = sphi 0, %s48
      %s52 = sphi 0, %s51
      %s68 = sphi 0, %s52
      %s72 = sphi 0, %s72
      %s74 = sphi 0, %s72
      %s75 = sphi 0, %s74
      %s89 = sphi 0, %s75
      %s93 = sphi 0, %s93
      %s95 = sphi 0, %s93
      %s96 = sphi 0, %s95
      %s110 = sphi 0, %s96
      %s114 = sphi 0, %s114
      %s116 = sphi 0, %s114
      %s117 = sphi 0, %s116
      %s131 = sphi 0, %s117
      %s135 = sphi 0, %s135
      %s137 = sphi 0, %s135
      %s138 = sphi 0, %s137
      %s152 = sphi 0, %s138
      %s158 = sphi 0, %s160
      %s161 = sphi 0, %s158
      %s162 = sphi 0, %s161
      %s178 = sphi 0, %s162
    $region4: #{gcn_first_forward.1} parent=1 // loop_header_branch
      %15 = sbr.rel (%p13) target = $region8
    $region5: #{gcn_first_forward.1} parent=1 // loop_body
      %s17 = ssub.s32 %s12, 1
      %s18 = ssub.s32 %s12, 2
      %s19 = sadd.s32 %s12, 1
      %s20 = ssub.s32 %s12, %s19
      %p21 = scmp.eq.s32.totalorder %s20, 0
      %s23 = sadd.s32 %s22, 1
      %s24 = scalar_select %p21, %s22, %s23
      %p27 = pneg %p21
      %p28 = scmp.eq.s32.totalorder %s12, 1
      %p29 = por %p27, %p28
      %p30 = scmp.ne.s32.totalorder %s22, %s25
      %p31 = scmp.eq.s32.totalorder %s12, 0
      %p32 = por %p30, %p31
      %p33 = scmp.ne.s32.totalorder %s22, %s25
      %p34 = scmp.eq.s32.totalorder %s17, 1
      %p35 = por %p33, %p34
      %p36 = scmp.ne.s32.totalorder %s25, %s26
      %p37 = scmp.eq.s32.totalorder %s17, 0
      %p38 = por %p36, %p37
      %p39 = scmp.ne.s32.totalorder %s25, %s26
      %p40 = scmp.eq.s32.totalorder %s18, 1
      %p41 = por %p39, %p40
      %p43 = scmp.ne.s32.totalorder %s26, %s42
      %p44 = scmp.eq.s32.totalorder %s18, 0
      %p45 = por %p43, %p44
      %s46 = ssub.s32 %s12, %s19
      %p47 = scmp.eq.s32.totalorder %s46, 0
      %s49 = sadd.s32 %s48, 1
      %s50 = scalar_select %p47, %s48, %s49
      %p53 = pneg %p47
      %p54 = scmp.eq.s32.totalorder %s12, 1
      %p55 = por %p53, %p54
      %p56 = scmp.ne.s32.totalorder %s48, %s51
      %p57 = scmp.eq.s32.totalorder %s12, 0
      %p58 = por %p56, %p57
      %p59 = scmp.ne.s32.totalorder %s48, %s51
      %p60 = scmp.eq.s32.totalorder %s17, 1
      %p61 = por %p59, %p60
      %p62 = scmp.ne.s32.totalorder %s51, %s52
      %p63 = scmp.eq.s32.totalorder %s17, 0
      %p64 = por %p62, %p63
      %p65 = scmp.ne.s32.totalorder %s51, %s52
      %p66 = scmp.eq.s32.totalorder %s18, 1
      %p67 = por %p65, %p66
      %p69 = scmp.ne.s32.totalorder %s52, %s68
      %p70 = scmp.eq.s32.totalorder %s18, 0
      %p71 = por %p69, %p70
      %s73 = sadd.s32 %s72, 1
      %p76 = scmp.eq.s32.totalorder %s12, 1
      %p77 = scmp.ne.s32.totalorder %s72, %s74
      %p78 = scmp.eq.s32.totalorder %s12, 0
      %p79 = por %p77, %p78
      %p80 = scmp.ne.s32.totalorder %s72, %s74
      %p81 = scmp.eq.s32.totalorder %s17, 1
      %p82 = por %p80, %p81
      %p83 = scmp.ne.s32.totalorder %s74, %s75
      %p84 = scmp.eq.s32.totalorder %s17, 0
      %p85 = por %p83, %p84
      %p86 = scmp.ne.s32.totalorder %s74, %s75
      %p87 = scmp.eq.s32.totalorder %s18, 1
      %p88 = por %p86, %p87
      %p90 = scmp.ne.s32.totalorder %s75, %s89
      %p91 = scmp.eq.s32.totalorder %s18, 0
      %p92 = por %p90, %p91
      %s94 = sadd.s32 %s93, 1
      %p97 = scmp.eq.s32.totalorder %s12, 1
      %p98 = scmp.ne.s32.totalorder %s93, %s95
      %p99 = scmp.eq.s32.totalorder %s12, 0
      %p100 = por %p98, %p99
      %p101 = scmp.ne.s32.totalorder %s93, %s95
      %p102 = scmp.eq.s32.totalorder %s17, 1
      %p103 = por %p101, %p102
      %p104 = scmp.ne.s32.totalorder %s95, %s96
      %p105 = scmp.eq.s32.totalorder %s17, 0
      %p106 = por %p104, %p105
      %p107 = scmp.ne.s32.totalorder %s95, %s96
      %p108 = scmp.eq.s32.totalorder %s18, 1
      %p109 = por %p107, %p108
      %p111 = scmp.ne.s32.totalorder %s96, %s110
      %p112 = scmp.eq.s32.totalorder %s18, 0
      %p113 = por %p111, %p112
      %s115 = sadd.s32 %s114, 1
      %p118 = scmp.eq.s32.totalorder %s12, 1
      %p119 = scmp.ne.s32.totalorder %s114, %s116
      %p120 = scmp.eq.s32.totalorder %s12, 0
      %p121 = por %p119, %p120
      %p122 = scmp.ne.s32.totalorder %s114, %s116
      %p123 = scmp.eq.s32.totalorder %s17, 1
      %p124 = por %p122, %p123
      %p125 = scmp.ne.s32.totalorder %s116, %s117
      %p126 = scmp.eq.s32.totalorder %s17, 0
      %p127 = por %p125, %p126
      %p128 = scmp.ne.s32.totalorder %s116, %s117
      %p129 = scmp.eq.s32.totalorder %s18, 1
      %p130 = por %p128, %p129
      %p132 = scmp.ne.s32.totalorder %s117, %s131
      %p133 = scmp.eq.s32.totalorder %s18, 0
      %p134 = por %p132, %p133
      %s136 = sadd.s32 %s135, 1
      %p139 = scmp.eq.s32.totalorder %s12, 1
      %p140 = scmp.ne.s32.totalorder %s135, %s137
      %p141 = scmp.eq.s32.totalorder %s12, 0
      %p142 = por %p140, %p141
      %p143 = scmp.ne.s32.totalorder %s135, %s137
      %p144 = scmp.eq.s32.totalorder %s17, 1
      %p145 = por %p143, %p144
      %p146 = scmp.ne.s32.totalorder %s137, %s138
      %p147 = scmp.eq.s32.totalorder %s17, 0
      %p148 = por %p146, %p147
      %p149 = scmp.ne.s32.totalorder %s137, %s138
      %p150 = scmp.eq.s32.totalorder %s18, 1
      %p151 = por %p149, %p150
      %p153 = scmp.ne.s32.totalorder %s138, %s152
      %p154 = scmp.eq.s32.totalorder %s18, 0
      %p155 = por %p153, %p154
      %s156 = ssub.s32 %s12, %s19
      %p157 = scmp.eq.s32.totalorder %s156, 0
      %s159 = sadd.s32 %s158, 1
      %s160 = scalar_select %p157, %s158, %s159
      %p163 = pneg %p157
      %p164 = scmp.eq.s32.totalorder %s12, 1
      %p165 = por %p163, %p164
      %p166 = scmp.ne.s32.totalorder %s158, %s161
      %p167 = scmp.eq.s32.totalorder %s12, 0
      %p168 = por %p166, %p167
      %p169 = scmp.ne.s32.totalorder %s158, %s161
      %p170 = scmp.eq.s32.totalorder %s17, 1
      %p171 = por %p169, %p170
      %p172 = scmp.ne.s32.totalorder %s161, %s162
      %p173 = scmp.eq.s32.totalorder %s17, 0
      %p174 = por %p172, %p173
      %p175 = scmp.ne.s32.totalorder %s161, %s162
      %p176 = scmp.eq.s32.totalorder %s18, 1
      %p177 = por %p175, %p176
      %p179 = scmp.ne.s32.totalorder %s162, %s178
      %p180 = scmp.eq.s32.totalorder %s18, 0
      %p181 = por %p179, %p180
      %p182 = scmp.le.s32.totalorder 1, %s12
      %p183 = scmp.lt.s32.totalorder %s12, 3
      %p184 = pnand %p182, %p183
      %p185 = pneg %p184
      // Predicated region
      $region9: #{gcn_first_forward.1} parent=5 // pred_check
        _
      $region10: #{gcn_first_forward.1} parent=5 // pred_check_branch
        %187 = sbr.rel (%p184) target = $region12
      $region11: #{gcn_first_forward.1} parent=5 // pred_region
        %s188 = ssub.s32 %s12, 1
        // Predicated region
        $region13: #{gcn_first_forward.1} parent=11 // pred_check
          %p189 = pneg %p85
        $region14: #{gcn_first_forward.1} parent=11 // pred_check_branch
          %191 = sbr.rel (%p189) target = $region16
        $region15: #{gcn_first_forward.1} parent=11 // pred_region
          _
        $region16: #{gcn_first_forward.1} parent=11 // pred_fallthru
          _
        // Predicated region
        $region17: #{gcn_first_forward.1} parent=11 // pred_check
          %p192 = pneg %p106
        $region18: #{gcn_first_forward.1} parent=11 // pred_check_branch
          %194 = sbr.rel (%p192) target = $region20
        $region19: #{gcn_first_forward.1} parent=11 // pred_region
          _
        $region20: #{gcn_first_forward.1} parent=11 // pred_fallthru
          _
        // Predicated region
        $region21: #{gcn_first_forward.1} parent=11 // pred_check
          %p195 = pneg %p127
        $region22: #{gcn_first_forward.1} parent=11 // pred_check_branch
          %197 = sbr.rel (%p195) target = $region24
        $region23: #{gcn_first_forward.1} parent=11 // pred_region
          _
        $region24: #{gcn_first_forward.1} parent=11 // pred_fallthru
          _
        // Predicated region
        $region25: #{gcn_first_forward.1} parent=11 // pred_check
          %p198 = pneg %p148
        $region26: #{gcn_first_forward.1} parent=11 // pred_check_branch
          %200 = sbr.rel (%p198) target = $region28
        $region27: #{gcn_first_forward.1} parent=11 // pred_region
          _
        $region28: #{gcn_first_forward.1} parent=11 // pred_fallthru
          _
      $region12: #{gcn_first_forward.1} parent=5 // pred_fallthru
        _
      %p201 = scmp.lt.s32.totalorder %s12, 2
      // Predicated region
      $region29: #{gcn_first_forward.1} parent=5 // pred_check
        %p202 = pneg %p201
      $region30: #{gcn_first_forward.1} parent=5 // pred_check_branch
        %204 = sbr.rel (%p202) target = $region32
      $region31: #{gcn_first_forward.1} parent=5 // pred_region
        // Predicated region
        $region33: #{gcn_first_forward.1} parent=31 // pred_check
          %p205 = pneg %p32
        $region34: #{gcn_first_forward.1} parent=31 // pred_check_branch
          %207 = sbr.rel (%p205) target = $region36
        $region35: #{gcn_first_forward.1} parent=31 // pred_region
          %s208 = smul.u32 16, %s12
          %p209 = scmp.lt.s32.totalorder %s208, 31
          %s210 = scalar_select %p209, %s208, 31
          %s211 = smul.addr %s210, 8
          %s212 = scalar_lea.vmem %s0, %s211
          %s213 = smul.u32 16, %s12
        $region36: #{gcn_first_forward.1} parent=31 // pred_fallthru
          _
        // Predicated region
        $region37: #{gcn_first_forward.1} parent=31 // pred_check
          %p214 = pneg %p58
        $region38: #{gcn_first_forward.1} parent=31 // pred_check_branch
          %216 = sbr.rel (%p214) target = $region40
        $region39: #{gcn_first_forward.1} parent=31 // pred_region
          %s217 = sand.u32 %s48, 1
          %s218 = sand.u32 %s48, 1
          %s219 = smul.addr %s218, 128
          %s220 = scalar_lea.vmem [#allocation2], %s219
          %s221 = smul.u32 16, %s12
          %s222 = smul.addr %s221, 4
          %s223 = scalar_lea.vmem %s1, %s222
          // Predicated region
          $region41: #{gcn_first_forward.1} parent=39 // pred_check
            _
          $region42: #{gcn_first_forward.1} parent=39 // pred_check_branch
            %225 = sbr.rel (0) target = $region44
          $region43: #{gcn_first_forward.1} parent=39 // pred_region
            // Predicated region
            $region45: #{gcn_first_forward.1} parent=43 // pred_check
              _
            $region46: #{gcn_first_forward.1} parent=43 // pred_check_branch
              %227 = sbr.rel target = $region48
            $region47: #{gcn_first_forward.1} parent=43 // pred_region
              // Predicated region
              $region60: #{gcn_first_forward.1} parent=47 // pred_check
                _
              $region61: #{gcn_first_forward.1} parent=47 // pred_check_branch
                %305 = sbr.rel (0) target = $region63
              $region62: #{gcn_first_forward.1} parent=47 // pred_region
                loop: start=0, step=1, limit=1
                $region64: #{gcn_first_forward.1} parent=62 // loop_pre_header
                  _
                $region65: #{gcn_first_forward.1} parent=62 // loop_header
                  %s307 = sphi 0, %s311
                  %p308 = scmp.ge.s32.totalorder %s307, 1
                  %s312 = sphi %s223, %s223
                  %s313 = sphi %s220, %s220
                $region66: #{gcn_first_forward.1} parent=62 // loop_header_branch
                  %310 = sbr.rel (%p308) target = $region70
                $region67: #{gcn_first_forward.1} parent=62 // loop_body
                  _
                $region68: #{gcn_first_forward.1} parent=62 // loop_footer
                  %s311 = sadd.s32 1, %s307
                $region69: #{gcn_first_forward.1} parent=62 // loop_footer_branch
                  %306 = sbr.rel target = $region65
                $region70: #{gcn_first_forward.1} parent=62 // loop_exit
                  _
                %s315 = ssub.s32 16, 1
                loop: start=0, step=1, limit=1
                $region71: #{gcn_first_forward.1} parent=62 // loop_pre_header
                  _
                $region72: #{gcn_first_forward.1} parent=62 // loop_header
                  %s317 = sphi 0, %s321
                  %p318 = scmp.ge.s32.totalorder %s317, 1
                  %s322 = sphi %s223, %s223
                  %s323 = sphi %s220, %s220
                $region73: #{gcn_first_forward.1} parent=62 // loop_header_branch
                  %320 = sbr.rel (%p318) target = $region77
                $region74: #{gcn_first_forward.1} parent=62 // loop_body
                  %v324 = vld [vmem:[%s322] sm:%s315]
                  %325 = vst [vmem:[%s323] sm:%s315] %v324
                  %v326 = vld [vmem:[%s322 + $0x4] sm:%s315]
                  %327 = vst [vmem:[%s323 + $0x4] sm:%s315] %v326
                  %v328 = vld [vmem:[%s322 + $0x8] sm:%s315]
                  %329 = vst [vmem:[%s323 + $0x8] sm:%s315] %v328
                  %v330 = vld [vmem:[%s322 + $0xc] sm:%s315]
                  %331 = vst [vmem:[%s323 + $0xc] sm:%s315] %v330
                  %v332 = vld [vmem:[%s322 + $0x10] sm:%s315]
                  %333 = vst [vmem:[%s323 + $0x10] sm:%s315] %v332
                  %v334 = vld [vmem:[%s322 + $0x14] sm:%s315]
                  %335 = vst [vmem:[%s323 + $0x14] sm:%s315] %v334
                  %v336 = vld [vmem:[%s322 + $0x18] sm:%s315]
                  %337 = vst [vmem:[%s323 + $0x18] sm:%s315] %v336
                  %v338 = vld [vmem:[%s322 + $0x1c] sm:%s315]
                  %339 = vst [vmem:[%s323 + $0x1c] sm:%s315] %v338
                  %v340 = vld [vmem:[%s322 + $0x20] sm:%s315]
                  %341 = vst [vmem:[%s323 + $0x20] sm:%s315] %v340
                  %v342 = vld [vmem:[%s322 + $0x24] sm:%s315]
                  %343 = vst [vmem:[%s323 + $0x24] sm:%s315] %v342
                  %v344 = vld [vmem:[%s322 + $0x28] sm:%s315]
                  %345 = vst [vmem:[%s323 + $0x28] sm:%s315] %v344
                  %v346 = vld [vmem:[%s322 + $0x2c] sm:%s315]
                  %347 = vst [vmem:[%s323 + $0x2c] sm:%s315] %v346
                  %v348 = vld [vmem:[%s322 + $0x30] sm:%s315]
                  %349 = vst [vmem:[%s323 + $0x30] sm:%s315] %v348
                  %v350 = vld [vmem:[%s322 + $0x34] sm:%s315]
                  %351 = vst [vmem:[%s323 + $0x34] sm:%s315] %v350
                  %v352 = vld [vmem:[%s322 + $0x38] sm:%s315]
                  %353 = vst [vmem:[%s323 + $0x38] sm:%s315] %v352
                  %v354 = vld [vmem:[%s322 + $0x3c] sm:%s315]
                  %355 = vst [vmem:[%s323 + $0x3c] sm:%s315] %v354
                  %v356 = vld [vmem:[%s322 + $0x80] sm:%s315]
                  %357 = vst [vmem:[%s323 + $0x40] sm:%s315] %v356
                  %v358 = vld [vmem:[%s322 + $0x84] sm:%s315]
                  %359 = vst [vmem:[%s323 + $0x44] sm:%s315] %v358
                  %v360 = vld [vmem:[%s322 + $0x88] sm:%s315]
                  %361 = vst [vmem:[%s323 + $0x48] sm:%s315] %v360
                  %v362 = vld [vmem:[%s322 + $0x8c] sm:%s315]
                  %363 = vst [vmem:[%s323 + $0x4c] sm:%s315] %v362
                  %v364 = vld [vmem:[%s322 + $0x90] sm:%s315]
                  %365 = vst [vmem:[%s323 + $0x50] sm:%s315] %v364
                  %v366 = vld [vmem:[%s322 + $0x94] sm:%s315]
                  %367 = vst [vmem:[%s323 + $0x54] sm:%s315] %v366
                  %v368 = vld [vmem:[%s322 + $0x98] sm:%s315]
                  %369 = vst [vmem:[%s323 + $0x58] sm:%s315] %v368
                  %v370 = vld [vmem:[%s322 + $0x9c] sm:%s315]
                  %371 = vst [vmem:[%s323 + $0x5c] sm:%s315] %v370
                  %v372 = vld [vmem:[%s322 + $0xa0] sm:%s315]
                  %373 = vst [vmem:[%s323 + $0x60] sm:%s315] %v372
                  %v374 = vld [vmem:[%s322 + $0xa4] sm:%s315]
                  %375 = vst [vmem:[%s323 + $0x64] sm:%s315] %v374
                  %v376 = vld [vmem:[%s322 + $0xa8] sm:%s315]
                  %377 = vst [vmem:[%s323 + $0x68] sm:%s315] %v376
                  %v378 = vld [vmem:[%s322 + $0xac] sm:%s315]
                  %379 = vst [vmem:[%s323 + $0x6c] sm:%s315] %v378
                  %v380 = vld [vmem:[%s322 + $0xb0] sm:%s315]
                  %381 = vst [vmem:[%s323 + $0x70] sm:%s315] %v380
                  %v382 = vld [vmem:[%s322 + $0xb4] sm:%s315]
                  %383 = vst [vmem:[%s323 + $0x74] sm:%s315] %v382
                  %v384 = vld [vmem:[%s322 + $0xb8] sm:%s315]
                  %385 = vst [vmem:[%s323 + $0x78] sm:%s315] %v384
                  %v386 = vld [vmem:[%s322 + $0xbc] sm:%s315]
                  %387 = vst [vmem:[%s323 + $0x7c] sm:%s315] %v386
                $region75: #{gcn_first_forward.1} parent=62 // loop_footer
                  %s321 = sadd.s32 1, %s317
                $region76: #{gcn_first_forward.1} parent=62 // loop_footer_branch
                  %316 = sbr.rel target = $region72
                $region77: #{gcn_first_forward.1} parent=62 // loop_exit
                  _
              $region63: #{gcn_first_forward.1} parent=47 // pred_fallthru
                _
            $region48: #{gcn_first_forward.1} parent=43 // pred_fallthru
              _
            // Predicated region
            $region49: #{gcn_first_forward.1} parent=43 // pred_check
              _
            $region50: #{gcn_first_forward.1} parent=43 // pred_check_branch
              %229 = sbr.rel (0) target = $region52
            $region51: #{gcn_first_forward.1} parent=43 // pred_region
              %s231 = ssub.s32 16, 1
              loop: start=0, step=1, limit=1
              $region53: #{gcn_first_forward.1} parent=51 // loop_pre_header
                _
              $region54: #{gcn_first_forward.1} parent=51 // loop_header
                %s233 = sphi 0, %s237
                %p234 = scmp.ge.s32.totalorder %s233, 1
                %s238 = sphi %s223, %s223
                %s239 = sphi %s220, %s220
              $region55: #{gcn_first_forward.1} parent=51 // loop_header_branch
                %236 = sbr.rel (%p234) target = $region59
              $region56: #{gcn_first_forward.1} parent=51 // loop_body
                %v240 = vld [vmem:[%s238] sm:%s231]
                %241 = vst [vmem:[%s239] sm:%s231] %v240
                %v242 = vld [vmem:[%s238 + $0x4] sm:%s231]
                %243 = vst [vmem:[%s239 + $0x4] sm:%s231] %v242
                %v244 = vld [vmem:[%s238 + $0x8] sm:%s231]
                %245 = vst [vmem:[%s239 + $0x8] sm:%s231] %v244
                %v246 = vld [vmem:[%s238 + $0xc] sm:%s231]
                %247 = vst [vmem:[%s239 + $0xc] sm:%s231] %v246
                %v248 = vld [vmem:[%s238 + $0x10] sm:%s231]
                %249 = vst [vmem:[%s239 + $0x10] sm:%s231] %v248
                %v250 = vld [vmem:[%s238 + $0x14] sm:%s231]
                %251 = vst [vmem:[%s239 + $0x14] sm:%s231] %v250
                %v252 = vld [vmem:[%s238 + $0x18] sm:%s231]
                %253 = vst [vmem:[%s239 + $0x18] sm:%s231] %v252
                %v254 = vld [vmem:[%s238 + $0x1c] sm:%s231]
                %255 = vst [vmem:[%s239 + $0x1c] sm:%s231] %v254
                %v256 = vld [vmem:[%s238 + $0x20] sm:%s231]
                %257 = vst [vmem:[%s239 + $0x20] sm:%s231] %v256
                %v258 = vld [vmem:[%s238 + $0x24] sm:%s231]
                %259 = vst [vmem:[%s239 + $0x24] sm:%s231] %v258
                %v260 = vld [vmem:[%s238 + $0x28] sm:%s231]
                %261 = vst [vmem:[%s239 + $0x28] sm:%s231] %v260
                %v262 = vld [vmem:[%s238 + $0x2c] sm:%s231]
                %263 = vst [vmem:[%s239 + $0x2c] sm:%s231] %v262
                %v264 = vld [vmem:[%s238 + $0x30] sm:%s231]
                %265 = vst [vmem:[%s239 + $0x30] sm:%s231] %v264
                %v266 = vld [vmem:[%s238 + $0x34] sm:%s231]
                %267 = vst [vmem:[%s239 + $0x34] sm:%s231] %v266
                %v268 = vld [vmem:[%s238 + $0x38] sm:%s231]
                %269 = vst [vmem:[%s239 + $0x38] sm:%s231] %v268
                %v270 = vld [vmem:[%s238 + $0x3c] sm:%s231]
                %271 = vst [vmem:[%s239 + $0x3c] sm:%s231] %v270
                %v272 = vld [vmem:[%s238 + $0x80] sm:%s231]
                %273 = vst [vmem:[%s239 + $0x40] sm:%s231] %v272
                %v274 = vld [vmem:[%s238 + $0x84] sm:%s231]
                %275 = vst [vmem:[%s239 + $0x44] sm:%s231] %v274
                %v276 = vld [vmem:[%s238 + $0x88] sm:%s231]
                %277 = vst [vmem:[%s239 + $0x48] sm:%s231] %v276
                %v278 = vld [vmem:[%s238 + $0x8c] sm:%s231]
                %279 = vst [vmem:[%s239 + $0x4c] sm:%s231] %v278
                %v280 = vld [vmem:[%s238 + $0x90] sm:%s231]
                %281 = vst [vmem:[%s239 + $0x50] sm:%s231] %v280
                %v282 = vld [vmem:[%s238 + $0x94] sm:%s231]
                %283 = vst [vmem:[%s239 + $0x54] sm:%s231] %v282
                %v284 = vld [vmem:[%s238 + $0x98] sm:%s231]
                %285 = vst [vmem:[%s239 + $0x58] sm:%s231] %v284
                %v286 = vld [vmem:[%s238 + $0x9c] sm:%s231]
                %287 = vst [vmem:[%s239 + $0x5c] sm:%s231] %v286
                %v288 = vld [vmem:[%s238 + $0xa0] sm:%s231]
                %289 = vst [vmem:[%s239 + $0x60] sm:%s231] %v288
                %v290 = vld [vmem:[%s238 + $0xa4] sm:%s231]
                %291 = vst [vmem:[%s239 + $0x64] sm:%s231] %v290
                %v292 = vld [vmem:[%s238 + $0xa8] sm:%s231]
                %293 = vst [vmem:[%s239 + $0x68] sm:%s231] %v292
                %v294 = vld [vmem:[%s238 + $0xac] sm:%s231]
                %295 = vst [vmem:[%s239 + $0x6c] sm:%s231] %v294
                %v296 = vld [vmem:[%s238 + $0xb0] sm:%s231]
                %297 = vst [vmem:[%s239 + $0x70] sm:%s231] %v296
                %v298 = vld [vmem:[%s238 + $0xb4] sm:%s231]
                %299 = vst [vmem:[%s239 + $0x74] sm:%s231] %v298
                %v300 = vld [vmem:[%s238 + $0xb8] sm:%s231]
                %301 = vst [vmem:[%s239 + $0x78] sm:%s231] %v300
                %v302 = vld [vmem:[%s238 + $0xbc] sm:%s231]
                %303 = vst [vmem:[%s239 + $0x7c] sm:%s231] %v302
              $region57: #{gcn_first_forward.1} parent=51 // loop_footer
                %s237 = sadd.s32 1, %s233
              $region58: #{gcn_first_forward.1} parent=51 // loop_footer_branch
                %232 = sbr.rel target = $region54
              $region59: #{gcn_first_forward.1} parent=51 // loop_exit
                _
            $region52: #{gcn_first_forward.1} parent=43 // pred_fallthru
              _
          $region44: #{gcn_first_forward.1} parent=39 // pred_fallthru
            _
          %388 = vnop
        $region40: #{gcn_first_forward.1} parent=31 // pred_fallthru
          _
      $region32: #{gcn_first_forward.1} parent=5 // pred_fallthru
        _
      %p389 = scmp.le.s32.totalorder 1, %s12
      %p390 = scmp.lt.s32.totalorder %s12, 3
      %p391 = pnand %p389, %p390
      %p392 = pneg %p391
      // Predicated region
      $region78: #{gcn_first_forward.1} parent=5 // pred_check
        _
      $region79: #{gcn_first_forward.1} parent=5 // pred_check_branch
        %394 = sbr.rel (%p391) target = $region81
      $region80: #{gcn_first_forward.1} parent=5 // pred_region
        %s395 = ssub.s32 %s12, 1
        %s396 = sand.u32 %s51, 1
        %s397 = sand.u32 %s51, 1
        %s398 = smul.addr %s397, 128
        %s399 = scalar_lea.vmem [#allocation2], %s398
        // Predicated region
        $region82: #{gcn_first_forward.1} parent=80 // pred_check
          %p400 = pneg %p64
        $region83: #{gcn_first_forward.1} parent=80 // pred_check_branch
          %402 = sbr.rel (%p400) target = $region85
        $region84: #{gcn_first_forward.1} parent=80 // pred_region
          _
        $region85: #{gcn_first_forward.1} parent=80 // pred_fallthru
          _
        %s403 = smul.u32 16, %s17
        %p404 = scmp.lt.s32.totalorder %s403, 31
        %s405 = scalar_select %p404, %s403, 31
        %s406 = smul.addr %s405, 8
        %s407 = scalar_lea.vmem %s0, %s406
        %p408 = pneg %p38
        %p409 = pneg %p35
        %s410 = sand.u32 %s51, 1
        %s411 = sand.u32 %s51, 1
        %s412 = smul.addr %s411, 128
        %s413 = scalar_lea.vmem [#allocation2], %s412
        %p414 = pneg %p64
        %p415 = pneg %p61
        %p416 = pneg %p85
        %p417 = pneg %p82
        %p418 = pneg %p106
        %p419 = pneg %p103
        %p420 = pneg %p127
        %p421 = pneg %p124
        %p422 = pneg %p148
        %p423 = pneg %p145
        %p424 = pneg %p174
        %p425 = pneg %p171
        %s426 = smul.u32 16, %s17
        %p427 = scmp.lt.s32.totalorder %s426, 31
        %s428 = scalar_select %p427, %s426, 31
        %s429 = smul.addr %s428, 8
        %s430 = scalar_lea.vmem %s6, %s429
        %s431 = smul.u32 16, %s17
        %p432 = scmp.lt.s32.totalorder %s431, 31
        %s433 = scalar_select %p432, %s431, 31
        %s434 = smul.addr %s433, 8
        %s435 = scalar_lea.vmem %s0, %s434
        %s436 = smul.u32 16, %s17
        %s437 = smul.u32 16, %s17
        %s438 = smul.u32 16, %s17
        %p439 = scmp.lt.s32.totalorder %s438, 31
        %s440 = scalar_select %p439, %s438, 31
        %s441 = smul.addr %s440, 8
        %s442 = scalar_lea.vmem %s6, %s441
        %s443 = smul.u32 16, %s17
        %v445 = vld [vmem:[%s435] sm:$0xff]
        %v446 = vld [vmem:[%s435 + $0x8] sm:$0xff]
        %v447 = vld [vmem:[%s435 + $0x10] sm:$0xff]
        %v448 = vld [vmem:[%s435 + $0x18] sm:$0xff]
        %v449 = vld [vmem:[%s435 + $0x20] sm:$0xff]
        %v450 = vld [vmem:[%s435 + $0x28] sm:$0xff]
        %v451 = vld [vmem:[%s435 + $0x30] sm:$0xff]
        %v452 = vld [vmem:[%s435 + $0x38] sm:$0xff]
        %v453 = vld [vmem:[%s435 + $0x40] sm:$0xff]
        %v454 = vld [vmem:[%s435 + $0x48] sm:$0xff]
        %v455 = vld [vmem:[%s435 + $0x50] sm:$0xff]
        %v456 = vld [vmem:[%s435 + $0x58] sm:$0xff]
        %v457 = vld [vmem:[%s435 + $0x60] sm:$0xff]
        %v458 = vld [vmem:[%s435 + $0x68] sm:$0xff]
        %v459 = vld [vmem:[%s435 + $0x70] sm:$0xff]
        %v460 = vld [vmem:[%s435 + $0x78] sm:$0xff]
        %v461 = vpack.c.bf16 %v446, %v445
        %v462 = vpack.c.bf16 %v448, %v447
        %v463 = vpack.c.bf16 %v450, %v449
        %v464 = vpack.c.bf16 %v452, %v451
        %v465 = vpack.c.bf16 %v454, %v453
        %v466 = vpack.c.bf16 %v456, %v455
        %v467 = vpack.c.bf16 %v458, %v457
        %v468 = vpack.c.bf16 %v460, %v459
        %v469 = vld [vmem:[%s2] sm:$0xf]
        %v470 = vld [vmem:[%s2 + $0x4] sm:$0xf]
        %v471 = vld [vmem:[%s2 + $0x8] sm:$0xf]
        %v472 = vld [vmem:[%s2 + $0xc] sm:$0xf]
        %v473 = vld [vmem:[%s2 + $0x10] sm:$0xf]
        %v474 = vld [vmem:[%s2 + $0x14] sm:$0xf]
        %v475 = vld [vmem:[%s2 + $0x18] sm:$0xf]
        %v476 = vld [vmem:[%s2 + $0x1c] sm:$0xf]
        %v477 = vld [vmem:[%s2 + $0x20] sm:$0xf]
        %v478 = vld [vmem:[%s2 + $0x24] sm:$0xf]
        %v479 = vld [vmem:[%s2 + $0x28] sm:$0xf]
        %v480 = vld [vmem:[%s2 + $0x2c] sm:$0xf]
        %v481 = vld [vmem:[%s2 + $0x30] sm:$0xf]
        %v482 = vld [vmem:[%s2 + $0x34] sm:$0xf]
        %v483 = vld [vmem:[%s2 + $0x38] sm:$0xf]
        %v484 = vld [vmem:[%s2 + $0x3c] sm:$0xf]
        %v501 = vunpack.c.l.b16 %v469
        %v502 = vunpack.c.l.b16 %v470
        %v503 = vunpack.c.l.b16 %v471
        %v504 = vunpack.c.l.b16 %v472
        %v505 = vunpack.c.l.b16 %v473
        %v506 = vunpack.c.l.b16 %v474
        %v507 = vunpack.c.l.b16 %v475
        %v508 = vunpack.c.l.b16 %v476
        %v509 = vunpack.c.l.b16 %v477
        %v510 = vunpack.c.l.b16 %v478
        %v511 = vunpack.c.l.b16 %v479
        %v512 = vunpack.c.l.b16 %v480
        %v513 = vunpack.c.l.b16 %v481
        %v514 = vunpack.c.l.b16 %v482
        %v515 = vunpack.c.l.b16 %v483
        %v516 = vunpack.c.l.b16 %v484
        %v517 = vpack.c.b16 %v502, %v501
        %v518 = vpack.c.b16 %v504, %v503
        %v519 = vpack.c.b16 %v506, %v505
        %v520 = vpack.c.b16 %v508, %v507
        %v521 = vpack.c.b16 %v510, %v509
        %v522 = vpack.c.b16 %v512, %v511
        %v523 = vpack.c.b16 %v514, %v513
        %v524 = vpack.c.b16 %v516, %v515
        %533 = vmatprep.subr.bf16.mxu0 0
        %534 = vmatpush1.bf16.msra.mxu0 %v524
        %535 = vmatprep.subr.bf16.mxu0 0
        %536 = vmatpush1.bf16.msra.mxu0 %v523
        %537 = vmatprep.subr.bf16.mxu0 0
        %538 = vmatpush1.bf16.msra.mxu0 %v522
        %539 = vmatprep.subr.bf16.mxu0 0
        %540 = vmatpush1.bf16.msra.mxu0 %v521
        %541 = vmatprep.subr.bf16.mxu0 0
        %542 = vmatpush1.bf16.msra.mxu0 %v520
        %543 = vmatprep.subr.bf16.mxu0 0
        %544 = vmatpush1.bf16.msra.mxu0 %v519
        %545 = vmatprep.subr.bf16.mxu0 0
        %546 = vmatpush1.bf16.msra.mxu0 %v518
        %547 = vmatprep.subr.bf16.mxu0 0
        %548 = vmatpush1.bf16.msra.mxu0 %v517
        %549 = vmatprep.subr.bf16.mxu0 0
        %550 = vmatpush2.bf16.msra.mxu0 0
        %551 = vmatprep.subr.bf16.mxu0 0
        %552 = vmatpush2.bf16.msra.mxu0 0
        %553 = vmatprep.subr.bf16.mxu0 0
        %554 = vmatpush2.bf16.msra.mxu0 0
        %555 = vmatprep.subr.bf16.mxu0 0
        %556 = vmatpush2.bf16.msra.mxu0 0
        %557 = vmatprep.subr.bf16.mxu0 0
        %558 = vmatpush2.bf16.msra.mxu0 0
        %559 = vmatprep.subr.bf16.mxu0 0
        %560 = vmatpush2.bf16.msra.mxu0 0
        %561 = vmatprep.subr.bf16.mxu0 0
        %562 = vmatpush2.bf16.msra.mxu0 0
        %563 = vmatprep.subr.bf16.mxu0 0
        %564 = vmatpush2.bf16.msra.mxu0 0
        %565 = vmatprep.mubr.bf16.mxu0 0
        %566 = vmatmul.mubr.bf16.gmra.mxu0 %v461
        %v567 = vpop.f32.mrf.mxu0
        %v568 = vadd.f32 0.0, %v567
        %v569 = vpop.f32.mrf.mxu0
        %v570 = vpop.f32.mrf.mxu0
        %v571 = vadd.f32 0.0, %v570
        %v572 = vpop.f32.mrf.mxu0
        %573 = vmatprep.mubr.bf16.mxu0 0
        %574 = vmatmul.mubr.bf16.gmra.mxu0 %v462
        %v575 = vpop.f32.mrf.mxu0
        %v576 = vadd.f32 0.0, %v575
        %v577 = vpop.f32.mrf.mxu0
        %v578 = vpop.f32.mrf.mxu0
        %v579 = vadd.f32 0.0, %v578
        %v580 = vpop.f32.mrf.mxu0
        %581 = vmatprep.mubr.bf16.mxu0 0
        %582 = vmatmul.mubr.bf16.gmra.mxu0 %v463
        %v583 = vpop.f32.mrf.mxu0
        %v584 = vadd.f32 0.0, %v583
        %v585 = vpop.f32.mrf.mxu0
        %v586 = vpop.f32.mrf.mxu0
        %v587 = vadd.f32 0.0, %v586
        %v588 = vpop.f32.mrf.mxu0
        %589 = vmatprep.mubr.bf16.mxu0 0
        %590 = vmatmul.mubr.bf16.gmra.mxu0 %v464
        %v591 = vpop.f32.mrf.mxu0
        %v592 = vadd.f32 0.0, %v591
        %v593 = vpop.f32.mrf.mxu0
        %v594 = vpop.f32.mrf.mxu0
        %v595 = vadd.f32 0.0, %v594
        %v596 = vpop.f32.mrf.mxu0
        %597 = vmatprep.mubr.bf16.mxu0 0
        %598 = vmatmul.mubr.bf16.gmra.mxu0 %v465
        %v599 = vpop.f32.mrf.mxu0
        %v600 = vadd.f32 0.0, %v599
        %v601 = vpop.f32.mrf.mxu0
        %v602 = vpop.f32.mrf.mxu0
        %v603 = vadd.f32 0.0, %v602
        %v604 = vpop.f32.mrf.mxu0
        %605 = vmatprep.mubr.bf16.mxu0 0
        %606 = vmatmul.mubr.bf16.gmra.mxu0 %v466
        %v607 = vpop.f32.mrf.mxu0
        %v608 = vadd.f32 0.0, %v607
        %v609 = vpop.f32.mrf.mxu0
        %v610 = vpop.f32.mrf.mxu0
        %v611 = vadd.f32 0.0, %v610
        %v612 = vpop.f32.mrf.mxu0
        %613 = vmatprep.mubr.bf16.mxu0 0
        %614 = vmatmul.mubr.bf16.gmra.mxu0 %v467
        %v615 = vpop.f32.mrf.mxu0
        %v616 = vadd.f32 0.0, %v615
        %v617 = vpop.f32.mrf.mxu0
        %v618 = vpop.f32.mrf.mxu0
        %v619 = vadd.f32 0.0, %v618
        %v620 = vpop.f32.mrf.mxu0
        %621 = vmatprep.mubr.bf16.mxu0 0
        %622 = vmatmul.mubr.bf16.gmra.mxu0 %v468
        %v623 = vpop.f32.mrf.mxu0
        %v624 = vadd.f32 0.0, %v623
        %v625 = vpop.f32.mrf.mxu0
        %v626 = vpop.f32.mrf.mxu0
        %v627 = vadd.f32 0.0, %v626
        %v628 = vpop.f32.mrf.mxu0
        %629 = vdwg.mxu0
        %v630 = vld [vmem:[%s399] sm:$0xf]
        %v631 = vld [vmem:[%s399 + $0x4] sm:$0xf]
        %v632 = vld [vmem:[%s399 + $0x8] sm:$0xf]
        %v633 = vld [vmem:[%s399 + $0xc] sm:$0xf]
        %v634 = vld [vmem:[%s399 + $0x10] sm:$0xf]
        %v635 = vld [vmem:[%s399 + $0x14] sm:$0xf]
        %v636 = vld [vmem:[%s399 + $0x18] sm:$0xf]
        %v637 = vld [vmem:[%s399 + $0x1c] sm:$0xf]
        %v638 = vld [vmem:[%s399 + $0x20] sm:$0xf]
        %v639 = vld [vmem:[%s399 + $0x24] sm:$0xf]
        %v640 = vld [vmem:[%s399 + $0x28] sm:$0xf]
        %v641 = vld [vmem:[%s399 + $0x2c] sm:$0xf]
        %v642 = vld [vmem:[%s399 + $0x30] sm:$0xf]
        %v643 = vld [vmem:[%s399 + $0x34] sm:$0xf]
        %v644 = vld [vmem:[%s399 + $0x38] sm:$0xf]
        %v645 = vld [vmem:[%s399 + $0x3c] sm:$0xf]
        %v646 = vpack.c.bf16 %v568, %v568
        %v647 = vpack.c.bf16 %v571, %v571
        %v648 = vpack.c.bf16 %v576, %v576
        %v649 = vpack.c.bf16 %v579, %v579
        %v650 = vpack.c.bf16 %v584, %v584
        %v651 = vpack.c.bf16 %v587, %v587
        %v652 = vpack.c.bf16 %v592, %v592
        %v653 = vpack.c.bf16 %v595, %v595
        %v654 = vpack.c.bf16 %v600, %v600
        %v655 = vpack.c.bf16 %v603, %v603
        %v656 = vpack.c.bf16 %v608, %v608
        %v657 = vpack.c.bf16 %v611, %v611
        %v658 = vpack.c.bf16 %v616, %v616
        %v659 = vpack.c.bf16 %v619, %v619
        %v660 = vpack.c.bf16 %v624, %v624
        %v661 = vpack.c.bf16 %v627, %v627
        %v662 = vld [vmem:[%s3] sm:$0x1]
        %v664 = vlaneseq
        %v665 = vshrl.u32 %v664, 7
        %v666 = vsub.s32 0, %v665
        %v667 = vrot.slane %v662, %v666
        %vm669 = vcmask 64512
        %v671 = vsel %vm669, %v630, 0
        %vm673 = vcmask 1043456
        %v675 = vsel %vm673, %v646, 0
        %677 = vmatprep.subr.bf16.mxu0 0
        %678 = vmatpush1.bf16.msra.mxu0 0
        %679 = vmatprep.subr.bf16.mxu0 0
        %680 = vmatpush1.bf16.msra.mxu0 0
        %681 = vmatprep.subr.bf16.mxu0 0
        %682 = vmatpush1.bf16.msra.mxu0 0
        %683 = vmatprep.subr.bf16.mxu0 0
        %684 = vmatpush1.bf16.msra.mxu0 0
        %685 = vmatprep.subr.bf16.mxu0 0
        %686 = vmatpush1.bf16.msra.mxu0 0
        %687 = vmatprep.subr.bf16.mxu0 0
        %688 = vmatpush1.bf16.msra.mxu0 0
        %689 = vmatprep.subr.bf16.mxu0 0
        %690 = vmatpush1.bf16.msra.mxu0 0
        %691 = vmatprep.subr.bf16.mxu0 0
        %692 = vmatpush1.bf16.msra.mxu0 %v675
        %693 = vmatprep.subr.bf16.mxu0 0
        %694 = vmatpush2.bf16.msra.mxu0 0
        %695 = vmatprep.subr.bf16.mxu0 0
        %696 = vmatpush2.bf16.msra.mxu0 0
        %697 = vmatprep.subr.bf16.mxu0 0
        %698 = vmatpush2.bf16.msra.mxu0 0
        %699 = vmatprep.subr.bf16.mxu0 0
        %700 = vmatpush2.bf16.msra.mxu0 0
        %701 = vmatprep.subr.bf16.mxu0 0
        %702 = vmatpush2.bf16.msra.mxu0 0
        %703 = vmatprep.subr.bf16.mxu0 0
        %704 = vmatpush2.bf16.msra.mxu0 0
        %705 = vmatprep.subr.bf16.mxu0 0
        %706 = vmatpush2.bf16.msra.mxu0 0
        %707 = vmatprep.subr.bf16.mxu0 0
        %708 = vmatpush2.bf16.msra.mxu0 0
        %709 = vmatprep.mubr.bf16.mxu0 0
        %710 = vmatmul.mubr.bf16.gmra.mxu0 %v671
        %v711 = vpop.f32.mrf.mxu0
        %v712 = vadd.f32 %v667, %v711
        %v713 = vpop.f32.mrf.mxu0
        %v714 = vpop.f32.mrf.mxu0
        %v715 = vpop.f32.mrf.mxu0
        %716 = vdwg.mxu0
        %v718 = vsel %vm669, %v631, 0
        %v721 = vsel %vm673, %v647, 0
        %723 = vmatprep.subr.bf16.mxu0 0
        %724 = vmatpush1.bf16.msra.mxu0 0
        %725 = vmatprep.subr.bf16.mxu0 0
        %726 = vmatpush1.bf16.msra.mxu0 0
        %727 = vmatprep.subr.bf16.mxu0 0
        %728 = vmatpush1.bf16.msra.mxu0 0
        %729 = vmatprep.subr.bf16.mxu0 0
        %730 = vmatpush1.bf16.msra.mxu0 0
        %731 = vmatprep.subr.bf16.mxu0 0
        %732 = vmatpush1.bf16.msra.mxu0 0
        %733 = vmatprep.subr.bf16.mxu0 0
        %734 = vmatpush1.bf16.msra.mxu0 0
        %735 = vmatprep.subr.bf16.mxu0 0
        %736 = vmatpush1.bf16.msra.mxu0 0
        %737 = vmatprep.subr.bf16.mxu0 0
        %738 = vmatpush1.bf16.msra.mxu0 %v721
        %739 = vmatprep.subr.bf16.mxu0 0
        %740 = vmatpush2.bf16.msra.mxu0 0
        %741 = vmatprep.subr.bf16.mxu0 0
        %742 = vmatpush2.bf16.msra.mxu0 0
        %743 = vmatprep.subr.bf16.mxu0 0
        %744 = vmatpush2.bf16.msra.mxu0 0
        %745 = vmatprep.subr.bf16.mxu0 0
        %746 = vmatpush2.bf16.msra.mxu0 0
        %747 = vmatprep.subr.bf16.mxu0 0
        %748 = vmatpush2.bf16.msra.mxu0 0
        %749 = vmatprep.subr.bf16.mxu0 0
        %750 = vmatpush2.bf16.msra.mxu0 0
        %751 = vmatprep.subr.bf16.mxu0 0
        %752 = vmatpush2.bf16.msra.mxu0 0
        %753 = vmatprep.subr.bf16.mxu0 0
        %754 = vmatpush2.bf16.msra.mxu0 0
        %755 = vmatprep.mubr.bf16.mxu0 0
        %756 = vmatmul.mubr.bf16.gmra.mxu0 %v718
        %v757 = vpop.f32.mrf.mxu0
        %v758 = vadd.f32 %v667, %v757
        %v759 = vpop.f32.mrf.mxu0
        %v760 = vpop.f32.mrf.mxu0
        %v761 = vpop.f32.mrf.mxu0
        %762 = vdwg.mxu0
        %v764 = vsel %vm669, %v632, 0
        %v767 = vsel %vm673, %v648, 0
        %769 = vmatprep.subr.bf16.mxu0 0
        %770 = vmatpush1.bf16.msra.mxu0 0
        %771 = vmatprep.subr.bf16.mxu0 0
        %772 = vmatpush1.bf16.msra.mxu0 0
        %773 = vmatprep.subr.bf16.mxu0 0
        %774 = vmatpush1.bf16.msra.mxu0 0
        %775 = vmatprep.subr.bf16.mxu0 0
        %776 = vmatpush1.bf16.msra.mxu0 0
        %777 = vmatprep.subr.bf16.mxu0 0
        %778 = vmatpush1.bf16.msra.mxu0 0
        %779 = vmatprep.subr.bf16.mxu0 0
        %780 = vmatpush1.bf16.msra.mxu0 0
        %781 = vmatprep.subr.bf16.mxu0 0
        %782 = vmatpush1.bf16.msra.mxu0 0
        %783 = vmatprep.subr.bf16.mxu0 0
        %784 = vmatpush1.bf16.msra.mxu0 %v767
        %785 = vmatprep.subr.bf16.mxu0 0
        %786 = vmatpush2.bf16.msra.mxu0 0
        %787 = vmatprep.subr.bf16.mxu0 0
        %788 = vmatpush2.bf16.msra.mxu0 0
        %789 = vmatprep.subr.bf16.mxu0 0
        %790 = vmatpush2.bf16.msra.mxu0 0
        %791 = vmatprep.subr.bf16.mxu0 0
        %792 = vmatpush2.bf16.msra.mxu0 0
        %793 = vmatprep.subr.bf16.mxu0 0
        %794 = vmatpush2.bf16.msra.mxu0 0
        %795 = vmatprep.subr.bf16.mxu0 0
        %796 = vmatpush2.bf16.msra.mxu0 0
        %797 = vmatprep.subr.bf16.mxu0 0
        %798 = vmatpush2.bf16.msra.mxu0 0
        %799 = vmatprep.subr.bf16.mxu0 0
        %800 = vmatpush2.bf16.msra.mxu0 0
        %801 = vmatprep.mubr.bf16.mxu0 0
        %802 = vmatmul.mubr.bf16.gmra.mxu0 %v764
        %v803 = vpop.f32.mrf.mxu0
        %v804 = vadd.f32 %v667, %v803
        %v805 = vpop.f32.mrf.mxu0
        %v806 = vpop.f32.mrf.mxu0
        %v807 = vpop.f32.mrf.mxu0
        %808 = vdwg.mxu0
        %v810 = vsel %vm669, %v633, 0
        %v813 = vsel %vm673, %v649, 0
        %815 = vmatprep.subr.bf16.mxu0 0
        %816 = vmatpush1.bf16.msra.mxu0 0
        %817 = vmatprep.subr.bf16.mxu0 0
        %818 = vmatpush1.bf16.msra.mxu0 0
        %819 = vmatprep.subr.bf16.mxu0 0
        %820 = vmatpush1.bf16.msra.mxu0 0
        %821 = vmatprep.subr.bf16.mxu0 0
        %822 = vmatpush1.bf16.msra.mxu0 0
        %823 = vmatprep.subr.bf16.mxu0 0
        %824 = vmatpush1.bf16.msra.mxu0 0
        %825 = vmatprep.subr.bf16.mxu0 0
        %826 = vmatpush1.bf16.msra.mxu0 0
        %827 = vmatprep.subr.bf16.mxu0 0
        %828 = vmatpush1.bf16.msra.mxu0 0
        %829 = vmatprep.subr.bf16.mxu0 0
        %830 = vmatpush1.bf16.msra.mxu0 %v813
        %831 = vmatprep.subr.bf16.mxu0 0
        %832 = vmatpush2.bf16.msra.mxu0 0
        %833 = vmatprep.subr.bf16.mxu0 0
        %834 = vmatpush2.bf16.msra.mxu0 0
        %835 = vmatprep.subr.bf16.mxu0 0
        %836 = vmatpush2.bf16.msra.mxu0 0
        %837 = vmatprep.subr.bf16.mxu0 0
        %838 = vmatpush2.bf16.msra.mxu0 0
        %839 = vmatprep.subr.bf16.mxu0 0
        %840 = vmatpush2.bf16.msra.mxu0 0
        %841 = vmatprep.subr.bf16.mxu0 0
        %842 = vmatpush2.bf16.msra.mxu0 0
        %843 = vmatprep.subr.bf16.mxu0 0
        %844 = vmatpush2.bf16.msra.mxu0 0
        %845 = vmatprep.subr.bf16.mxu0 0
        %846 = vmatpush2.bf16.msra.mxu0 0
        %847 = vmatprep.mubr.bf16.mxu0 0
        %848 = vmatmul.mubr.bf16.gmra.mxu0 %v810
        %v849 = vpop.f32.mrf.mxu0
        %v850 = vadd.f32 %v667, %v849
        %v851 = vpop.f32.mrf.mxu0
        %v852 = vpop.f32.mrf.mxu0
        %v853 = vpop.f32.mrf.mxu0
        %854 = vdwg.mxu0
        %v856 = vsel %vm669, %v634, 0
        %v859 = vsel %vm673, %v650, 0
        %861 = vmatprep.subr.bf16.mxu0 0
        %862 = vmatpush1.bf16.msra.mxu0 0
        %863 = vmatprep.subr.bf16.mxu0 0
        %864 = vmatpush1.bf16.msra.mxu0 0
        %865 = vmatprep.subr.bf16.mxu0 0
        %866 = vmatpush1.bf16.msra.mxu0 0
        %867 = vmatprep.subr.bf16.mxu0 0
        %868 = vmatpush1.bf16.msra.mxu0 0
        %869 = vmatprep.subr.bf16.mxu0 0
        %870 = vmatpush1.bf16.msra.mxu0 0
        %871 = vmatprep.subr.bf16.mxu0 0
        %872 = vmatpush1.bf16.msra.mxu0 0
        %873 = vmatprep.subr.bf16.mxu0 0
        %874 = vmatpush1.bf16.msra.mxu0 0
        %875 = vmatprep.subr.bf16.mxu0 0
        %876 = vmatpush1.bf16.msra.mxu0 %v859
        %877 = vmatprep.subr.bf16.mxu0 0
        %878 = vmatpush2.bf16.msra.mxu0 0
        %879 = vmatprep.subr.bf16.mxu0 0
        %880 = vmatpush2.bf16.msra.mxu0 0
        %881 = vmatprep.subr.bf16.mxu0 0
        %882 = vmatpush2.bf16.msra.mxu0 0
        %883 = vmatprep.subr.bf16.mxu0 0
        %884 = vmatpush2.bf16.msra.mxu0 0
        %885 = vmatprep.subr.bf16.mxu0 0
        %886 = vmatpush2.bf16.msra.mxu0 0
        %887 = vmatprep.subr.bf16.mxu0 0
        %888 = vmatpush2.bf16.msra.mxu0 0
        %889 = vmatprep.subr.bf16.mxu0 0
        %890 = vmatpush2.bf16.msra.mxu0 0
        %891 = vmatprep.subr.bf16.mxu0 0
        %892 = vmatpush2.bf16.msra.mxu0 0
        %893 = vmatprep.mubr.bf16.mxu0 0
        %894 = vmatmul.mubr.bf16.gmra.mxu0 %v856
        %v895 = vpop.f32.mrf.mxu0
        %v896 = vadd.f32 %v667, %v895
        %v897 = vpop.f32.mrf.mxu0
        %v898 = vpop.f32.mrf.mxu0
        %v899 = vpop.f32.mrf.mxu0
        %900 = vdwg.mxu0
        %v902 = vsel %vm669, %v635, 0
        %v905 = vsel %vm673, %v651, 0
        %907 = vmatprep.subr.bf16.mxu0 0
        %908 = vmatpush1.bf16.msra.mxu0 0
        %909 = vmatprep.subr.bf16.mxu0 0
        %910 = vmatpush1.bf16.msra.mxu0 0
        %911 = vmatprep.subr.bf16.mxu0 0
        %912 = vmatpush1.bf16.msra.mxu0 0
        %913 = vmatprep.subr.bf16.mxu0 0
        %914 = vmatpush1.bf16.msra.mxu0 0
        %915 = vmatprep.subr.bf16.mxu0 0
        %916 = vmatpush1.bf16.msra.mxu0 0
        %917 = vmatprep.subr.bf16.mxu0 0
        %918 = vmatpush1.bf16.msra.mxu0 0
        %919 = vmatprep.subr.bf16.mxu0 0
        %920 = vmatpush1.bf16.msra.mxu0 0
        %921 = vmatprep.subr.bf16.mxu0 0
        %922 = vmatpush1.bf16.msra.mxu0 %v905
        %923 = vmatprep.subr.bf16.mxu0 0
        %924 = vmatpush2.bf16.msra.mxu0 0
        %925 = vmatprep.subr.bf16.mxu0 0
        %926 = vmatpush2.bf16.msra.mxu0 0
        %927 = vmatprep.subr.bf16.mxu0 0
        %928 = vmatpush2.bf16.msra.mxu0 0
        %929 = vmatprep.subr.bf16.mxu0 0
        %930 = vmatpush2.bf16.msra.mxu0 0
        %931 = vmatprep.subr.bf16.mxu0 0
        %932 = vmatpush2.bf16.msra.mxu0 0
        %933 = vmatprep.subr.bf16.mxu0 0
        %934 = vmatpush2.bf16.msra.mxu0 0
        %935 = vmatprep.subr.bf16.mxu0 0
        %936 = vmatpush2.bf16.msra.mxu0 0
        %937 = vmatprep.subr.bf16.mxu0 0
        %938 = vmatpush2.bf16.msra.mxu0 0
        %939 = vmatprep.mubr.bf16.mxu0 0
        %940 = vmatmul.mubr.bf16.gmra.mxu0 %v902
        %v941 = vpop.f32.mrf.mxu0
        %v942 = vadd.f32 %v667, %v941
        %v943 = vpop.f32.mrf.mxu0
        %v944 = vpop.f32.mrf.mxu0
        %v945 = vpop.f32.mrf.mxu0
        %946 = vdwg.mxu0
        %v948 = vsel %vm669, %v636, 0
        %v951 = vsel %vm673, %v652, 0
        %953 = vmatprep.subr.bf16.mxu0 0
        %954 = vmatpush1.bf16.msra.mxu0 0
        %955 = vmatprep.subr.bf16.mxu0 0
        %956 = vmatpush1.bf16.msra.mxu0 0
        %957 = vmatprep.subr.bf16.mxu0 0
        %958 = vmatpush1.bf16.msra.mxu0 0
        %959 = vmatprep.subr.bf16.mxu0 0
        %960 = vmatpush1.bf16.msra.mxu0 0
        %961 = vmatprep.subr.bf16.mxu0 0
        %962 = vmatpush1.bf16.msra.mxu0 0
        %963 = vmatprep.subr.bf16.mxu0 0
        %964 = vmatpush1.bf16.msra.mxu0 0
        %965 = vmatprep.subr.bf16.mxu0 0
        %966 = vmatpush1.bf16.msra.mxu0 0
        %967 = vmatprep.subr.bf16.mxu0 0
        %968 = vmatpush1.bf16.msra.mxu0 %v951
        %969 = vmatprep.subr.bf16.mxu0 0
        %970 = vmatpush2.bf16.msra.mxu0 0
        %971 = vmatprep.subr.bf16.mxu0 0
        %972 = vmatpush2.bf16.msra.mxu0 0
        %973 = vmatprep.subr.bf16.mxu0 0
        %974 = vmatpush2.bf16.msra.mxu0 0
        %975 = vmatprep.subr.bf16.mxu0 0
        %976 = vmatpush2.bf16.msra.mxu0 0
        %977 = vmatprep.subr.bf16.mxu0 0
        %978 = vmatpush2.bf16.msra.mxu0 0
        %979 = vmatprep.subr.bf16.mxu0 0
        %980 = vmatpush2.bf16.msra.mxu0 0
        %981 = vmatprep.subr.bf16.mxu0 0
        %982 = vmatpush2.bf16.msra.mxu0 0
        %983 = vmatprep.subr.bf16.mxu0 0
        %984 = vmatpush2.bf16.msra.mxu0 0
        %985 = vmatprep.mubr.bf16.mxu0 0
        %986 = vmatmul.mubr.bf16.gmra.mxu0 %v948
        %v987 = vpop.f32.mrf.mxu0
        %v988 = vadd.f32 %v667, %v987
        %v989 = vpop.f32.mrf.mxu0
        %v990 = vpop.f32.mrf.mxu0
        %v991 = vpop.f32.mrf.mxu0
        %992 = vdwg.mxu0
        %v994 = vsel %vm669, %v637, 0
        %v997 = vsel %vm673, %v653, 0
        %999 = vmatprep.subr.bf16.mxu0 0
        %1000 = vmatpush1.bf16.msra.mxu0 0
        %1001 = vmatprep.subr.bf16.mxu0 0
        %1002 = vmatpush1.bf16.msra.mxu0 0
        %1003 = vmatprep.subr.bf16.mxu0 0
        %1004 = vmatpush1.bf16.msra.mxu0 0
        %1005 = vmatprep.subr.bf16.mxu0 0
        %1006 = vmatpush1.bf16.msra.mxu0 0
        %1007 = vmatprep.subr.bf16.mxu0 0
        %1008 = vmatpush1.bf16.msra.mxu0 0
        %1009 = vmatprep.subr.bf16.mxu0 0
        %1010 = vmatpush1.bf16.msra.mxu0 0
        %1011 = vmatprep.subr.bf16.mxu0 0
        %1012 = vmatpush1.bf16.msra.mxu0 0
        %1013 = vmatprep.subr.bf16.mxu0 0
        %1014 = vmatpush1.bf16.msra.mxu0 %v997
        %1015 = vmatprep.subr.bf16.mxu0 0
        %1016 = vmatpush2.bf16.msra.mxu0 0
        %1017 = vmatprep.subr.bf16.mxu0 0
        %1018 = vmatpush2.bf16.msra.mxu0 0
        %1019 = vmatprep.subr.bf16.mxu0 0
        %1020 = vmatpush2.bf16.msra.mxu0 0
        %1021 = vmatprep.subr.bf16.mxu0 0
        %1022 = vmatpush2.bf16.msra.mxu0 0
        %1023 = vmatprep.subr.bf16.mxu0 0
        %1024 = vmatpush2.bf16.msra.mxu0 0
        %1025 = vmatprep.subr.bf16.mxu0 0
        %1026 = vmatpush2.bf16.msra.mxu0 0
        %1027 = vmatprep.subr.bf16.mxu0 0
        %1028 = vmatpush2.bf16.msra.mxu0 0
        %1029 = vmatprep.subr.bf16.mxu0 0
        %1030 = vmatpush2.bf16.msra.mxu0 0
        %1031 = vmatprep.mubr.bf16.mxu0 0
        %1032 = vmatmul.mubr.bf16.gmra.mxu0 %v994
        %v1033 = vpop.f32.mrf.mxu0
        %v1034 = vadd.f32 %v667, %v1033
        %v1035 = vpop.f32.mrf.mxu0
        %v1036 = vpop.f32.mrf.mxu0
        %v1037 = vpop.f32.mrf.mxu0
        %1038 = vdwg.mxu0
        %v1040 = vsel %vm669, %v638, 0
        %v1043 = vsel %vm673, %v654, 0
        %1045 = vmatprep.subr.bf16.mxu0 0
        %1046 = vmatpush1.bf16.msra.mxu0 0
        %1047 = vmatprep.subr.bf16.mxu0 0
        %1048 = vmatpush1.bf16.msra.mxu0 0
        %1049 = vmatprep.subr.bf16.mxu0 0
        %1050 = vmatpush1.bf16.msra.mxu0 0
        %1051 = vmatprep.subr.bf16.mxu0 0
        %1052 = vmatpush1.bf16.msra.mxu0 0
        %1053 = vmatprep.subr.bf16.mxu0 0
        %1054 = vmatpush1.bf16.msra.mxu0 0
        %1055 = vmatprep.subr.bf16.mxu0 0
        %1056 = vmatpush1.bf16.msra.mxu0 0
        %1057 = vmatprep.subr.bf16.mxu0 0
        %1058 = vmatpush1.bf16.msra.mxu0 0
        %1059 = vmatprep.subr.bf16.mxu0 0
        %1060 = vmatpush1.bf16.msra.mxu0 %v1043
        %1061 = vmatprep.subr.bf16.mxu0 0
        %1062 = vmatpush2.bf16.msra.mxu0 0
        %1063 = vmatprep.subr.bf16.mxu0 0
        %1064 = vmatpush2.bf16.msra.mxu0 0
        %1065 = vmatprep.subr.bf16.mxu0 0
        %1066 = vmatpush2.bf16.msra.mxu0 0
        %1067 = vmatprep.subr.bf16.mxu0 0
        %1068 = vmatpush2.bf16.msra.mxu0 0
        %1069 = vmatprep.subr.bf16.mxu0 0
        %1070 = vmatpush2.bf16.msra.mxu0 0
        %1071 = vmatprep.subr.bf16.mxu0 0
        %1072 = vmatpush2.bf16.msra.mxu0 0
        %1073 = vmatprep.subr.bf16.mxu0 0
        %1074 = vmatpush2.bf16.msra.mxu0 0
        %1075 = vmatprep.subr.bf16.mxu0 0
        %1076 = vmatpush2.bf16.msra.mxu0 0
        %1077 = vmatprep.mubr.bf16.mxu0 0
        %1078 = vmatmul.mubr.bf16.gmra.mxu0 %v1040
        %v1079 = vpop.f32.mrf.mxu0
        %v1080 = vadd.f32 %v667, %v1079
        %v1081 = vpop.f32.mrf.mxu0
        %v1082 = vpop.f32.mrf.mxu0
        %v1083 = vpop.f32.mrf.mxu0
        %1084 = vdwg.mxu0
        %v1086 = vsel %vm669, %v639, 0
        %v1089 = vsel %vm673, %v655, 0
        %1091 = vmatprep.subr.bf16.mxu0 0
        %1092 = vmatpush1.bf16.msra.mxu0 0
        %1093 = vmatprep.subr.bf16.mxu0 0
        %1094 = vmatpush1.bf16.msra.mxu0 0
        %1095 = vmatprep.subr.bf16.mxu0 0
        %1096 = vmatpush1.bf16.msra.mxu0 0
        %1097 = vmatprep.subr.bf16.mxu0 0
        %1098 = vmatpush1.bf16.msra.mxu0 0
        %1099 = vmatprep.subr.bf16.mxu0 0
        %1100 = vmatpush1.bf16.msra.mxu0 0
        %1101 = vmatprep.subr.bf16.mxu0 0
        %1102 = vmatpush1.bf16.msra.mxu0 0
        %1103 = vmatprep.subr.bf16.mxu0 0
        %1104 = vmatpush1.bf16.msra.mxu0 0
        %1105 = vmatprep.subr.bf16.mxu0 0
        %1106 = vmatpush1.bf16.msra.mxu0 %v1089
        %1107 = vmatprep.subr.bf16.mxu0 0
        %1108 = vmatpush2.bf16.msra.mxu0 0
        %1109 = vmatprep.subr.bf16.mxu0 0
        %1110 = vmatpush2.bf16.msra.mxu0 0
        %1111 = vmatprep.subr.bf16.mxu0 0
        %1112 = vmatpush2.bf16.msra.mxu0 0
        %1113 = vmatprep.subr.bf16.mxu0 0
        %1114 = vmatpush2.bf16.msra.mxu0 0
        %1115 = vmatprep.subr.bf16.mxu0 0
        %1116 = vmatpush2.bf16.msra.mxu0 0
        %1117 = vmatprep.subr.bf16.mxu0 0
        %1118 = vmatpush2.bf16.msra.mxu0 0
        %1119 = vmatprep.subr.bf16.mxu0 0
        %1120 = vmatpush2.bf16.msra.mxu0 0
        %1121 = vmatprep.subr.bf16.mxu0 0
        %1122 = vmatpush2.bf16.msra.mxu0 0
        %1123 = vmatprep.mubr.bf16.mxu0 0
        %1124 = vmatmul.mubr.bf16.gmra.mxu0 %v1086
        %v1125 = vpop.f32.mrf.mxu0
        %v1126 = vadd.f32 %v667, %v1125
        %v1127 = vpop.f32.mrf.mxu0
        %v1128 = vpop.f32.mrf.mxu0
        %v1129 = vpop.f32.mrf.mxu0
        %1130 = vdwg.mxu0
        %v1132 = vsel %vm669, %v640, 0
        %v1135 = vsel %vm673, %v656, 0
        %1137 = vmatprep.subr.bf16.mxu0 0
        %1138 = vmatpush1.bf16.msra.mxu0 0
        %1139 = vmatprep.subr.bf16.mxu0 0
        %1140 = vmatpush1.bf16.msra.mxu0 0
        %1141 = vmatprep.subr.bf16.mxu0 0
        %1142 = vmatpush1.bf16.msra.mxu0 0
        %1143 = vmatprep.subr.bf16.mxu0 0
        %1144 = vmatpush1.bf16.msra.mxu0 0
        %1145 = vmatprep.subr.bf16.mxu0 0
        %1146 = vmatpush1.bf16.msra.mxu0 0
        %1147 = vmatprep.subr.bf16.mxu0 0
        %1148 = vmatpush1.bf16.msra.mxu0 0
        %1149 = vmatprep.subr.bf16.mxu0 0
        %1150 = vmatpush1.bf16.msra.mxu0 0
        %1151 = vmatprep.subr.bf16.mxu0 0
        %1152 = vmatpush1.bf16.msra.mxu0 %v1135
        %1153 = vmatprep.subr.bf16.mxu0 0
        %1154 = vmatpush2.bf16.msra.mxu0 0
        %1155 = vmatprep.subr.bf16.mxu0 0
        %1156 = vmatpush2.bf16.msra.mxu0 0
        %1157 = vmatprep.subr.bf16.mxu0 0
        %1158 = vmatpush2.bf16.msra.mxu0 0
        %1159 = vmatprep.subr.bf16.mxu0 0
        %1160 = vmatpush2.bf16.msra.mxu0 0
        %1161 = vmatprep.subr.bf16.mxu0 0
        %1162 = vmatpush2.bf16.msra.mxu0 0
        %1163 = vmatprep.subr.bf16.mxu0 0
        %1164 = vmatpush2.bf16.msra.mxu0 0
        %1165 = vmatprep.subr.bf16.mxu0 0
        %1166 = vmatpush2.bf16.msra.mxu0 0
        %1167 = vmatprep.subr.bf16.mxu0 0
        %1168 = vmatpush2.bf16.msra.mxu0 0
        %1169 = vmatprep.mubr.bf16.mxu0 0
        %1170 = vmatmul.mubr.bf16.gmra.mxu0 %v1132
        %v1171 = vpop.f32.mrf.mxu0
        %v1172 = vadd.f32 %v667, %v1171
        %v1173 = vpop.f32.mrf.mxu0
        %v1174 = vpop.f32.mrf.mxu0
        %v1175 = vpop.f32.mrf.mxu0
        %1176 = vdwg.mxu0
        %v1178 = vsel %vm669, %v641, 0
        %v1181 = vsel %vm673, %v657, 0
        %1183 = vmatprep.subr.bf16.mxu0 0
        %1184 = vmatpush1.bf16.msra.mxu0 0
        %1185 = vmatprep.subr.bf16.mxu0 0
        %1186 = vmatpush1.bf16.msra.mxu0 0
        %1187 = vmatprep.subr.bf16.mxu0 0
        %1188 = vmatpush1.bf16.msra.mxu0 0
        %1189 = vmatprep.subr.bf16.mxu0 0
        %1190 = vmatpush1.bf16.msra.mxu0 0
        %1191 = vmatprep.subr.bf16.mxu0 0
        %1192 = vmatpush1.bf16.msra.mxu0 0
        %1193 = vmatprep.subr.bf16.mxu0 0
        %1194 = vmatpush1.bf16.msra.mxu0 0
        %1195 = vmatprep.subr.bf16.mxu0 0
        %1196 = vmatpush1.bf16.msra.mxu0 0
        %1197 = vmatprep.subr.bf16.mxu0 0
        %1198 = vmatpush1.bf16.msra.mxu0 %v1181
        %1199 = vmatprep.subr.bf16.mxu0 0
        %1200 = vmatpush2.bf16.msra.mxu0 0
        %1201 = vmatprep.subr.bf16.mxu0 0
        %1202 = vmatpush2.bf16.msra.mxu0 0
        %1203 = vmatprep.subr.bf16.mxu0 0
        %1204 = vmatpush2.bf16.msra.mxu0 0
        %1205 = vmatprep.subr.bf16.mxu0 0
        %1206 = vmatpush2.bf16.msra.mxu0 0
        %1207 = vmatprep.subr.bf16.mxu0 0
        %1208 = vmatpush2.bf16.msra.mxu0 0
        %1209 = vmatprep.subr.bf16.mxu0 0
        %1210 = vmatpush2.bf16.msra.mxu0 0
        %1211 = vmatprep.subr.bf16.mxu0 0
        %1212 = vmatpush2.bf16.msra.mxu0 0
        %1213 = vmatprep.subr.bf16.mxu0 0
        %1214 = vmatpush2.bf16.msra.mxu0 0
        %1215 = vmatprep.mubr.bf16.mxu0 0
        %1216 = vmatmul.mubr.bf16.gmra.mxu0 %v1178
        %v1217 = vpop.f32.mrf.mxu0
        %v1218 = vadd.f32 %v667, %v1217
        %v1219 = vpop.f32.mrf.mxu0
        %v1220 = vpop.f32.mrf.mxu0
        %v1221 = vpop.f32.mrf.mxu0
        %1222 = vdwg.mxu0
        %v1224 = vsel %vm669, %v642, 0
        %v1227 = vsel %vm673, %v658, 0
        %1229 = vmatprep.subr.bf16.mxu0 0
        %1230 = vmatpush1.bf16.msra.mxu0 0
        %1231 = vmatprep.subr.bf16.mxu0 0
        %1232 = vmatpush1.bf16.msra.mxu0 0
        %1233 = vmatprep.subr.bf16.mxu0 0
        %1234 = vmatpush1.bf16.msra.mxu0 0
        %1235 = vmatprep.subr.bf16.mxu0 0
        %1236 = vmatpush1.bf16.msra.mxu0 0
        %1237 = vmatprep.subr.bf16.mxu0 0
        %1238 = vmatpush1.bf16.msra.mxu0 0
        %1239 = vmatprep.subr.bf16.mxu0 0
        %1240 = vmatpush1.bf16.msra.mxu0 0
        %1241 = vmatprep.subr.bf16.mxu0 0
        %1242 = vmatpush1.bf16.msra.mxu0 0
        %1243 = vmatprep.subr.bf16.mxu0 0
        %1244 = vmatpush1.bf16.msra.mxu0 %v1227
        %1245 = vmatprep.subr.bf16.mxu0 0
        %1246 = vmatpush2.bf16.msra.mxu0 0
        %1247 = vmatprep.subr.bf16.mxu0 0
        %1248 = vmatpush2.bf16.msra.mxu0 0
        %1249 = vmatprep.subr.bf16.mxu0 0
        %1250 = vmatpush2.bf16.msra.mxu0 0
        %1251 = vmatprep.subr.bf16.mxu0 0
        %1252 = vmatpush2.bf16.msra.mxu0 0
        %1253 = vmatprep.subr.bf16.mxu0 0
        %1254 = vmatpush2.bf16.msra.mxu0 0
        %1255 = vmatprep.subr.bf16.mxu0 0
        %1256 = vmatpush2.bf16.msra.mxu0 0
        %1257 = vmatprep.subr.bf16.mxu0 0
        %1258 = vmatpush2.bf16.msra.mxu0 0
        %1259 = vmatprep.subr.bf16.mxu0 0
        %1260 = vmatpush2.bf16.msra.mxu0 0
        %1261 = vmatprep.mubr.bf16.mxu0 0
        %1262 = vmatmul.mubr.bf16.gmra.mxu0 %v1224
        %v1263 = vpop.f32.mrf.mxu0
        %v1264 = vadd.f32 %v667, %v1263
        %v1265 = vpop.f32.mrf.mxu0
        %v1266 = vpop.f32.mrf.mxu0
        %v1267 = vpop.f32.mrf.mxu0
        %1268 = vdwg.mxu0
        %v1270 = vsel %vm669, %v643, 0
        %v1273 = vsel %vm673, %v659, 0
        %1275 = vmatprep.subr.bf16.mxu0 0
        %1276 = vmatpush1.bf16.msra.mxu0 0
        %1277 = vmatprep.subr.bf16.mxu0 0
        %1278 = vmatpush1.bf16.msra.mxu0 0
        %1279 = vmatprep.subr.bf16.mxu0 0
        %1280 = vmatpush1.bf16.msra.mxu0 0
        %1281 = vmatprep.subr.bf16.mxu0 0
        %1282 = vmatpush1.bf16.msra.mxu0 0
        %1283 = vmatprep.subr.bf16.mxu0 0
        %1284 = vmatpush1.bf16.msra.mxu0 0
        %1285 = vmatprep.subr.bf16.mxu0 0
        %1286 = vmatpush1.bf16.msra.mxu0 0
        %1287 = vmatprep.subr.bf16.mxu0 0
        %1288 = vmatpush1.bf16.msra.mxu0 0
        %1289 = vmatprep.subr.bf16.mxu0 0
        %1290 = vmatpush1.bf16.msra.mxu0 %v1273
        %1291 = vmatprep.subr.bf16.mxu0 0
        %1292 = vmatpush2.bf16.msra.mxu0 0
        %1293 = vmatprep.subr.bf16.mxu0 0
        %1294 = vmatpush2.bf16.msra.mxu0 0
        %1295 = vmatprep.subr.bf16.mxu0 0
        %1296 = vmatpush2.bf16.msra.mxu0 0
        %1297 = vmatprep.subr.bf16.mxu0 0
        %1298 = vmatpush2.bf16.msra.mxu0 0
        %1299 = vmatprep.subr.bf16.mxu0 0
        %1300 = vmatpush2.bf16.msra.mxu0 0
        %1301 = vmatprep.subr.bf16.mxu0 0
        %1302 = vmatpush2.bf16.msra.mxu0 0
        %1303 = vmatprep.subr.bf16.mxu0 0
        %1304 = vmatpush2.bf16.msra.mxu0 0
        %1305 = vmatprep.subr.bf16.mxu0 0
        %1306 = vmatpush2.bf16.msra.mxu0 0
        %1307 = vmatprep.mubr.bf16.mxu0 0
        %1308 = vmatmul.mubr.bf16.gmra.mxu0 %v1270
        %v1309 = vpop.f32.mrf.mxu0
        %v1310 = vadd.f32 %v667, %v1309
        %v1311 = vpop.f32.mrf.mxu0
        %v1312 = vpop.f32.mrf.mxu0
        %v1313 = vpop.f32.mrf.mxu0
        %1314 = vdwg.mxu0
        %v1316 = vsel %vm669, %v644, 0
        %v1319 = vsel %vm673, %v660, 0
        %1321 = vmatprep.subr.bf16.mxu0 0
        %1322 = vmatpush1.bf16.msra.mxu0 0
        %1323 = vmatprep.subr.bf16.mxu0 0
        %1324 = vmatpush1.bf16.msra.mxu0 0
        %1325 = vmatprep.subr.bf16.mxu0 0
        %1326 = vmatpush1.bf16.msra.mxu0 0
        %1327 = vmatprep.subr.bf16.mxu0 0
        %1328 = vmatpush1.bf16.msra.mxu0 0
        %1329 = vmatprep.subr.bf16.mxu0 0
        %1330 = vmatpush1.bf16.msra.mxu0 0
        %1331 = vmatprep.subr.bf16.mxu0 0
        %1332 = vmatpush1.bf16.msra.mxu0 0
        %1333 = vmatprep.subr.bf16.mxu0 0
        %1334 = vmatpush1.bf16.msra.mxu0 0
        %1335 = vmatprep.subr.bf16.mxu0 0
        %1336 = vmatpush1.bf16.msra.mxu0 %v1319
        %1337 = vmatprep.subr.bf16.mxu0 0
        %1338 = vmatpush2.bf16.msra.mxu0 0
        %1339 = vmatprep.subr.bf16.mxu0 0
        %1340 = vmatpush2.bf16.msra.mxu0 0
        %1341 = vmatprep.subr.bf16.mxu0 0
        %1342 = vmatpush2.bf16.msra.mxu0 0
        %1343 = vmatprep.subr.bf16.mxu0 0
        %1344 = vmatpush2.bf16.msra.mxu0 0
        %1345 = vmatprep.subr.bf16.mxu0 0
        %1346 = vmatpush2.bf16.msra.mxu0 0
        %1347 = vmatprep.subr.bf16.mxu0 0
        %1348 = vmatpush2.bf16.msra.mxu0 0
        %1349 = vmatprep.subr.bf16.mxu0 0
        %1350 = vmatpush2.bf16.msra.mxu0 0
        %1351 = vmatprep.subr.bf16.mxu0 0
        %1352 = vmatpush2.bf16.msra.mxu0 0
        %1353 = vmatprep.mubr.bf16.mxu0 0
        %1354 = vmatmul.mubr.bf16.gmra.mxu0 %v1316
        %v1355 = vpop.f32.mrf.mxu0
        %v1356 = vadd.f32 %v667, %v1355
        %v1357 = vpop.f32.mrf.mxu0
        %v1358 = vpop.f32.mrf.mxu0
        %v1359 = vpop.f32.mrf.mxu0
        %1360 = vdwg.mxu0
        %v1362 = vsel %vm669, %v645, 0
        %v1365 = vsel %vm673, %v661, 0
        %1367 = vmatprep.subr.bf16.mxu0 0
        %1368 = vmatpush1.bf16.msra.mxu0 0
        %1369 = vmatprep.subr.bf16.mxu0 0
        %1370 = vmatpush1.bf16.msra.mxu0 0
        %1371 = vmatprep.subr.bf16.mxu0 0
        %1372 = vmatpush1.bf16.msra.mxu0 0
        %1373 = vmatprep.subr.bf16.mxu0 0
        %1374 = vmatpush1.bf16.msra.mxu0 0
        %1375 = vmatprep.subr.bf16.mxu0 0
        %1376 = vmatpush1.bf16.msra.mxu0 0
        %1377 = vmatprep.subr.bf16.mxu0 0
        %1378 = vmatpush1.bf16.msra.mxu0 0
        %1379 = vmatprep.subr.bf16.mxu0 0
        %1380 = vmatpush1.bf16.msra.mxu0 0
        %1381 = vmatprep.subr.bf16.mxu0 0
        %1382 = vmatpush1.bf16.msra.mxu0 %v1365
        %1383 = vmatprep.subr.bf16.mxu0 0
        %1384 = vmatpush2.bf16.msra.mxu0 0
        %1385 = vmatprep.subr.bf16.mxu0 0
        %1386 = vmatpush2.bf16.msra.mxu0 0
        %1387 = vmatprep.subr.bf16.mxu0 0
        %1388 = vmatpush2.bf16.msra.mxu0 0
        %1389 = vmatprep.subr.bf16.mxu0 0
        %1390 = vmatpush2.bf16.msra.mxu0 0
        %1391 = vmatprep.subr.bf16.mxu0 0
        %1392 = vmatpush2.bf16.msra.mxu0 0
        %1393 = vmatprep.subr.bf16.mxu0 0
        %1394 = vmatpush2.bf16.msra.mxu0 0
        %1395 = vmatprep.subr.bf16.mxu0 0
        %1396 = vmatpush2.bf16.msra.mxu0 0
        %1397 = vmatprep.subr.bf16.mxu0 0
        %1398 = vmatpush2.bf16.msra.mxu0 0
        %1399 = vmatprep.mubr.bf16.mxu0 0
        %1400 = vmatmul.mubr.bf16.gmra.mxu0 %v1362
        %v1401 = vpop.f32.mrf.mxu0
        %v1402 = vadd.f32 %v667, %v1401
        %v1403 = vpop.f32.mrf.mxu0
        %v1404 = vpop.f32.mrf.mxu0
        %v1405 = vpop.f32.mrf.mxu0
        %1406 = vdwg.mxu0
        %v1407 = vmax.f32 %v712, 0.0
        %v1408 = vmax.f32 %v758, 0.0
        %v1409 = vmax.f32 %v804, 0.0
        %v1410 = vmax.f32 %v850, 0.0
        %v1411 = vmax.f32 %v896, 0.0
        %v1412 = vmax.f32 %v942, 0.0
        %v1413 = vmax.f32 %v988, 0.0
        %v1414 = vmax.f32 %v1034, 0.0
        %v1415 = vmax.f32 %v1080, 0.0
        %v1416 = vmax.f32 %v1126, 0.0
        %v1417 = vmax.f32 %v1172, 0.0
        %v1418 = vmax.f32 %v1218, 0.0
        %v1419 = vmax.f32 %v1264, 0.0
        %v1420 = vmax.f32 %v1310, 0.0
        %v1421 = vmax.f32 %v1356, 0.0
        %v1422 = vmax.f32 %v1402, 0.0
        %v1423 = vpack.c.bf16 %v1408, %v1407
        %v1424 = vpack.c.bf16 %v1410, %v1409
        %v1425 = vpack.c.bf16 %v1412, %v1411
        %v1426 = vpack.c.bf16 %v1414, %v1413
        %v1427 = vpack.c.bf16 %v1416, %v1415
        %v1428 = vpack.c.bf16 %v1418, %v1417
        %v1429 = vpack.c.bf16 %v1420, %v1419
        %v1430 = vpack.c.bf16 %v1422, %v1421
        %s1431 = scalar_lea.vmem %s2, 64
        %v1432 = vld [vmem:[%s1431] sm:$0xf]
        %v1433 = vld [vmem:[%s1431 + $0x4] sm:$0xf]
        %v1434 = vld [vmem:[%s1431 + $0x8] sm:$0xf]
        %v1435 = vld [vmem:[%s1431 + $0xc] sm:$0xf]
        %v1436 = vld [vmem:[%s1431 + $0x10] sm:$0xf]
        %v1437 = vld [vmem:[%s1431 + $0x14] sm:$0xf]
        %v1438 = vld [vmem:[%s1431 + $0x18] sm:$0xf]
        %v1439 = vld [vmem:[%s1431 + $0x1c] sm:$0xf]
        %v1440 = vld [vmem:[%s1431 + $0x20] sm:$0xf]
        %v1441 = vld [vmem:[%s1431 + $0x24] sm:$0xf]
        %v1442 = vld [vmem:[%s1431 + $0x28] sm:$0xf]
        %v1443 = vld [vmem:[%s1431 + $0x2c] sm:$0xf]
        %v1444 = vld [vmem:[%s1431 + $0x30] sm:$0xf]
        %v1445 = vld [vmem:[%s1431 + $0x34] sm:$0xf]
        %v1446 = vld [vmem:[%s1431 + $0x38] sm:$0xf]
        %v1447 = vld [vmem:[%s1431 + $0x3c] sm:$0xf]
        %v1464 = vunpack.c.l.b16 %v1432
        %v1465 = vunpack.c.l.b16 %v1433
        %v1466 = vunpack.c.l.b16 %v1434
        %v1467 = vunpack.c.l.b16 %v1435
        %v1468 = vunpack.c.l.b16 %v1436
        %v1469 = vunpack.c.l.b16 %v1437
        %v1470 = vunpack.c.l.b16 %v1438
        %v1471 = vunpack.c.l.b16 %v1439
        %v1472 = vunpack.c.l.b16 %v1440
        %v1473 = vunpack.c.l.b16 %v1441
        %v1474 = vunpack.c.l.b16 %v1442
        %v1475 = vunpack.c.l.b16 %v1443
        %v1476 = vunpack.c.l.b16 %v1444
        %v1477 = vunpack.c.l.b16 %v1445
        %v1478 = vunpack.c.l.b16 %v1446
        %v1479 = vunpack.c.l.b16 %v1447
        %v1480 = vpack.c.b16 %v1465, %v1464
        %v1481 = vpack.c.b16 %v1467, %v1466
        %v1482 = vpack.c.b16 %v1469, %v1468
        %v1483 = vpack.c.b16 %v1471, %v1470
        %v1484 = vpack.c.b16 %v1473, %v1472
        %v1485 = vpack.c.b16 %v1475, %v1474
        %v1486 = vpack.c.b16 %v1477, %v1476
        %v1487 = vpack.c.b16 %v1479, %v1478
        %1496 = vmatprep.subr.bf16.mxu0 0
        %1497 = vmatpush1.bf16.msra.mxu0 %v1487
        %1498 = vmatprep.subr.bf16.mxu0 0
        %1499 = vmatpush1.bf16.msra.mxu0 %v1486
        %1500 = vmatprep.subr.bf16.mxu0 0
        %1501 = vmatpush1.bf16.msra.mxu0 %v1485
        %1502 = vmatprep.subr.bf16.mxu0 0
        %1503 = vmatpush1.bf16.msra.mxu0 %v1484
        %1504 = vmatprep.subr.bf16.mxu0 0
        %1505 = vmatpush1.bf16.msra.mxu0 %v1483
        %1506 = vmatprep.subr.bf16.mxu0 0
        %1507 = vmatpush1.bf16.msra.mxu0 %v1482
        %1508 = vmatprep.subr.bf16.mxu0 0
        %1509 = vmatpush1.bf16.msra.mxu0 %v1481
        %1510 = vmatprep.subr.bf16.mxu0 0
        %1511 = vmatpush1.bf16.msra.mxu0 %v1480
        %1512 = vmatprep.subr.bf16.mxu0 0
        %1513 = vmatpush2.bf16.msra.mxu0 0
        %1514 = vmatprep.subr.bf16.mxu0 0
        %1515 = vmatpush2.bf16.msra.mxu0 0
        %1516 = vmatprep.subr.bf16.mxu0 0
        %1517 = vmatpush2.bf16.msra.mxu0 0
        %1518 = vmatprep.subr.bf16.mxu0 0
        %1519 = vmatpush2.bf16.msra.mxu0 0
        %1520 = vmatprep.subr.bf16.mxu0 0
        %1521 = vmatpush2.bf16.msra.mxu0 0
        %1522 = vmatprep.subr.bf16.mxu0 0
        %1523 = vmatpush2.bf16.msra.mxu0 0
        %1524 = vmatprep.subr.bf16.mxu0 0
        %1525 = vmatpush2.bf16.msra.mxu0 0
        %1526 = vmatprep.subr.bf16.mxu0 0
        %1527 = vmatpush2.bf16.msra.mxu0 0
        %1528 = vmatprep.mubr.bf16.mxu0 0
        %1529 = vmatmul.mubr.bf16.gmra.mxu0 %v1423
        %v1530 = vpop.f32.mrf.mxu0
        %v1531 = vadd.f32 0.0, %v1530
        %v1532 = vpop.f32.mrf.mxu0
        %v1533 = vpop.f32.mrf.mxu0
        %v1534 = vadd.f32 0.0, %v1533
        %v1535 = vpop.f32.mrf.mxu0
        %1536 = vmatprep.mubr.bf16.mxu0 0
        %1537 = vmatmul.mubr.bf16.gmra.mxu0 %v1424
        %v1538 = vpop.f32.mrf.mxu0
        %v1539 = vadd.f32 0.0, %v1538
        %v1540 = vpop.f32.mrf.mxu0
        %v1541 = vpop.f32.mrf.mxu0
        %v1542 = vadd.f32 0.0, %v1541
        %v1543 = vpop.f32.mrf.mxu0
        %1544 = vmatprep.mubr.bf16.mxu0 0
        %1545 = vmatmul.mubr.bf16.gmra.mxu0 %v1425
        %v1546 = vpop.f32.mrf.mxu0
        %v1547 = vadd.f32 0.0, %v1546
        %v1548 = vpop.f32.mrf.mxu0
        %v1549 = vpop.f32.mrf.mxu0
        %v1550 = vadd.f32 0.0, %v1549
        %v1551 = vpop.f32.mrf.mxu0
        %1552 = vmatprep.mubr.bf16.mxu0 0
        %1553 = vmatmul.mubr.bf16.gmra.mxu0 %v1426
        %v1554 = vpop.f32.mrf.mxu0
        %v1555 = vadd.f32 0.0, %v1554
        %v1556 = vpop.f32.mrf.mxu0
        %v1557 = vpop.f32.mrf.mxu0
        %v1558 = vadd.f32 0.0, %v1557
        %v1559 = vpop.f32.mrf.mxu0
        %1560 = vmatprep.mubr.bf16.mxu0 0
        %1561 = vmatmul.mubr.bf16.gmra.mxu0 %v1427
        %v1562 = vpop.f32.mrf.mxu0
        %v1563 = vadd.f32 0.0, %v1562
        %v1564 = vpop.f32.mrf.mxu0
        %v1565 = vpop.f32.mrf.mxu0
        %v1566 = vadd.f32 0.0, %v1565
        %v1567 = vpop.f32.mrf.mxu0
        %1568 = vmatprep.mubr.bf16.mxu0 0
        %1569 = vmatmul.mubr.bf16.gmra.mxu0 %v1428
        %v1570 = vpop.f32.mrf.mxu0
        %v1571 = vadd.f32 0.0, %v1570
        %v1572 = vpop.f32.mrf.mxu0
        %v1573 = vpop.f32.mrf.mxu0
        %v1574 = vadd.f32 0.0, %v1573
        %v1575 = vpop.f32.mrf.mxu0
        %1576 = vmatprep.mubr.bf16.mxu0 0
        %1577 = vmatmul.mubr.bf16.gmra.mxu0 %v1429
        %v1578 = vpop.f32.mrf.mxu0
        %v1579 = vadd.f32 0.0, %v1578
        %v1580 = vpop.f32.mrf.mxu0
        %v1581 = vpop.f32.mrf.mxu0
        %v1582 = vadd.f32 0.0, %v1581
        %v1583 = vpop.f32.mrf.mxu0
        %1584 = vmatprep.mubr.bf16.mxu0 0
        %1585 = vmatmul.mubr.bf16.gmra.mxu0 %v1430
        %v1586 = vpop.f32.mrf.mxu0
        %v1587 = vadd.f32 0.0, %v1586
        %v1588 = vpop.f32.mrf.mxu0
        %v1589 = vpop.f32.mrf.mxu0
        %v1590 = vadd.f32 0.0, %v1589
        %v1591 = vpop.f32.mrf.mxu0
        %1592 = vdwg.mxu0
        %s1593 = scalar_lea.vmem %s399, 64 [#allocation2]
        %v1594 = vld [vmem:[%s1593] sm:$0xf]
        %v1595 = vld [vmem:[%s1593 + $0x4] sm:$0xf]
        %v1596 = vld [vmem:[%s1593 + $0x8] sm:$0xf]
        %v1597 = vld [vmem:[%s1593 + $0xc] sm:$0xf]
        %v1598 = vld [vmem:[%s1593 + $0x10] sm:$0xf]
        %v1599 = vld [vmem:[%s1593 + $0x14] sm:$0xf]
        %v1600 = vld [vmem:[%s1593 + $0x18] sm:$0xf]
        %v1601 = vld [vmem:[%s1593 + $0x1c] sm:$0xf]
        %v1602 = vld [vmem:[%s1593 + $0x20] sm:$0xf]
        %v1603 = vld [vmem:[%s1593 + $0x24] sm:$0xf]
        %v1604 = vld [vmem:[%s1593 + $0x28] sm:$0xf]
        %v1605 = vld [vmem:[%s1593 + $0x2c] sm:$0xf]
        %v1606 = vld [vmem:[%s1593 + $0x30] sm:$0xf]
        %v1607 = vld [vmem:[%s1593 + $0x34] sm:$0xf]
        %v1608 = vld [vmem:[%s1593 + $0x38] sm:$0xf]
        %v1609 = vld [vmem:[%s1593 + $0x3c] sm:$0xf]
        %v1610 = vpack.c.bf16 %v1531, %v1531
        %v1611 = vpack.c.bf16 %v1534, %v1534
        %v1612 = vpack.c.bf16 %v1539, %v1539
        %v1613 = vpack.c.bf16 %v1542, %v1542
        %v1614 = vpack.c.bf16 %v1547, %v1547
        %v1615 = vpack.c.bf16 %v1550, %v1550
        %v1616 = vpack.c.bf16 %v1555, %v1555
        %v1617 = vpack.c.bf16 %v1558, %v1558
        %v1618 = vpack.c.bf16 %v1563, %v1563
        %v1619 = vpack.c.bf16 %v1566, %v1566
        %v1620 = vpack.c.bf16 %v1571, %v1571
        %v1621 = vpack.c.bf16 %v1574, %v1574
        %v1622 = vpack.c.bf16 %v1579, %v1579
        %v1623 = vpack.c.bf16 %v1582, %v1582
        %v1624 = vpack.c.bf16 %v1587, %v1587
        %v1625 = vpack.c.bf16 %v1590, %v1590
        %s1626 = scalar_lea.vmem %s3, 1
        %v1627 = vld [vmem:[%s1626] sm:$0x1]
        %v1629 = vlaneseq
        %v1630 = vshrl.u32 %v1629, 7
        %v1631 = vsub.s32 0, %v1630
        %v1632 = vrot.slane %v1627, %v1631
        %v1635 = vsel %vm669, %v1594, 0
        %v1638 = vsel %vm673, %v1610, 0
        %1640 = vmatprep.subr.bf16.mxu0 0
        %1641 = vmatpush1.bf16.msra.mxu0 0
        %1642 = vmatprep.subr.bf16.mxu0 0
        %1643 = vmatpush1.bf16.msra.mxu0 0
        %1644 = vmatprep.subr.bf16.mxu0 0
        %1645 = vmatpush1.bf16.msra.mxu0 0
        %1646 = vmatprep.subr.bf16.mxu0 0
        %1647 = vmatpush1.bf16.msra.mxu0 0
        %1648 = vmatprep.subr.bf16.mxu0 0
        %1649 = vmatpush1.bf16.msra.mxu0 0
        %1650 = vmatprep.subr.bf16.mxu0 0
        %1651 = vmatpush1.bf16.msra.mxu0 0
        %1652 = vmatprep.subr.bf16.mxu0 0
        %1653 = vmatpush1.bf16.msra.mxu0 0
        %1654 = vmatprep.subr.bf16.mxu0 0
        %1655 = vmatpush1.bf16.msra.mxu0 %v1638
        %1656 = vmatprep.subr.bf16.mxu0 0
        %1657 = vmatpush2.bf16.msra.mxu0 0
        %1658 = vmatprep.subr.bf16.mxu0 0
        %1659 = vmatpush2.bf16.msra.mxu0 0
        %1660 = vmatprep.subr.bf16.mxu0 0
        %1661 = vmatpush2.bf16.msra.mxu0 0
        %1662 = vmatprep.subr.bf16.mxu0 0
        %1663 = vmatpush2.bf16.msra.mxu0 0
        %1664 = vmatprep.subr.bf16.mxu0 0
        %1665 = vmatpush2.bf16.msra.mxu0 0
        %1666 = vmatprep.subr.bf16.mxu0 0
        %1667 = vmatpush2.bf16.msra.mxu0 0
        %1668 = vmatprep.subr.bf16.mxu0 0
        %1669 = vmatpush2.bf16.msra.mxu0 0
        %1670 = vmatprep.subr.bf16.mxu0 0
        %1671 = vmatpush2.bf16.msra.mxu0 0
        %1672 = vmatprep.mubr.bf16.mxu0 0
        %1673 = vmatmul.mubr.bf16.gmra.mxu0 %v1635
        %v1674 = vpop.f32.mrf.mxu0
        %v1675 = vadd.f32 %v1632, %v1674
        %v1676 = vpop.f32.mrf.mxu0
        %v1677 = vpop.f32.mrf.mxu0
        %v1678 = vpop.f32.mrf.mxu0
        %1679 = vdwg.mxu0
        %v1681 = vsel %vm669, %v1595, 0
        %v1684 = vsel %vm673, %v1611, 0
        %1686 = vmatprep.subr.bf16.mxu0 0
        %1687 = vmatpush1.bf16.msra.mxu0 0
        %1688 = vmatprep.subr.bf16.mxu0 0
        %1689 = vmatpush1.bf16.msra.mxu0 0
        %1690 = vmatprep.subr.bf16.mxu0 0
        %1691 = vmatpush1.bf16.msra.mxu0 0
        %1692 = vmatprep.subr.bf16.mxu0 0
        %1693 = vmatpush1.bf16.msra.mxu0 0
        %1694 = vmatprep.subr.bf16.mxu0 0
        %1695 = vmatpush1.bf16.msra.mxu0 0
        %1696 = vmatprep.subr.bf16.mxu0 0
        %1697 = vmatpush1.bf16.msra.mxu0 0
        %1698 = vmatprep.subr.bf16.mxu0 0
        %1699 = vmatpush1.bf16.msra.mxu0 0
        %1700 = vmatprep.subr.bf16.mxu0 0
        %1701 = vmatpush1.bf16.msra.mxu0 %v1684
        %1702 = vmatprep.subr.bf16.mxu0 0
        %1703 = vmatpush2.bf16.msra.mxu0 0
        %1704 = vmatprep.subr.bf16.mxu0 0
        %1705 = vmatpush2.bf16.msra.mxu0 0
        %1706 = vmatprep.subr.bf16.mxu0 0
        %1707 = vmatpush2.bf16.msra.mxu0 0
        %1708 = vmatprep.subr.bf16.mxu0 0
        %1709 = vmatpush2.bf16.msra.mxu0 0
        %1710 = vmatprep.subr.bf16.mxu0 0
        %1711 = vmatpush2.bf16.msra.mxu0 0
        %1712 = vmatprep.subr.bf16.mxu0 0
        %1713 = vmatpush2.bf16.msra.mxu0 0
        %1714 = vmatprep.subr.bf16.mxu0 0
        %1715 = vmatpush2.bf16.msra.mxu0 0
        %1716 = vmatprep.subr.bf16.mxu0 0
        %1717 = vmatpush2.bf16.msra.mxu0 0
        %1718 = vmatprep.mubr.bf16.mxu0 0
        %1719 = vmatmul.mubr.bf16.gmra.mxu0 %v1681
        %v1720 = vpop.f32.mrf.mxu0
        %v1721 = vadd.f32 %v1632, %v1720
        %v1722 = vpop.f32.mrf.mxu0
        %v1723 = vpop.f32.mrf.mxu0
        %v1724 = vpop.f32.mrf.mxu0
        %1725 = vdwg.mxu0
        %v1727 = vsel %vm669, %v1596, 0
        %v1730 = vsel %vm673, %v1612, 0
        %1732 = vmatprep.subr.bf16.mxu0 0
        %1733 = vmatpush1.bf16.msra.mxu0 0
        %1734 = vmatprep.subr.bf16.mxu0 0
        %1735 = vmatpush1.bf16.msra.mxu0 0
        %1736 = vmatprep.subr.bf16.mxu0 0
        %1737 = vmatpush1.bf16.msra.mxu0 0
        %1738 = vmatprep.subr.bf16.mxu0 0
        %1739 = vmatpush1.bf16.msra.mxu0 0
        %1740 = vmatprep.subr.bf16.mxu0 0
        %1741 = vmatpush1.bf16.msra.mxu0 0
        %1742 = vmatprep.subr.bf16.mxu0 0
        %1743 = vmatpush1.bf16.msra.mxu0 0
        %1744 = vmatprep.subr.bf16.mxu0 0
        %1745 = vmatpush1.bf16.msra.mxu0 0
        %1746 = vmatprep.subr.bf16.mxu0 0
        %1747 = vmatpush1.bf16.msra.mxu0 %v1730
        %1748 = vmatprep.subr.bf16.mxu0 0
        %1749 = vmatpush2.bf16.msra.mxu0 0
        %1750 = vmatprep.subr.bf16.mxu0 0
        %1751 = vmatpush2.bf16.msra.mxu0 0
        %1752 = vmatprep.subr.bf16.mxu0 0
        %1753 = vmatpush2.bf16.msra.mxu0 0
        %1754 = vmatprep.subr.bf16.mxu0 0
        %1755 = vmatpush2.bf16.msra.mxu0 0
        %1756 = vmatprep.subr.bf16.mxu0 0
        %1757 = vmatpush2.bf16.msra.mxu0 0
        %1758 = vmatprep.subr.bf16.mxu0 0
        %1759 = vmatpush2.bf16.msra.mxu0 0
        %1760 = vmatprep.subr.bf16.mxu0 0
        %1761 = vmatpush2.bf16.msra.mxu0 0
        %1762 = vmatprep.subr.bf16.mxu0 0
        %1763 = vmatpush2.bf16.msra.mxu0 0
        %1764 = vmatprep.mubr.bf16.mxu0 0
        %1765 = vmatmul.mubr.bf16.gmra.mxu0 %v1727
        %v1766 = vpop.f32.mrf.mxu0
        %v1767 = vadd.f32 %v1632, %v1766
        %v1768 = vpop.f32.mrf.mxu0
        %v1769 = vpop.f32.mrf.mxu0
        %v1770 = vpop.f32.mrf.mxu0
        %1771 = vdwg.mxu0
        %v1773 = vsel %vm669, %v1597, 0
        %v1776 = vsel %vm673, %v1613, 0
        %1778 = vmatprep.subr.bf16.mxu0 0
        %1779 = vmatpush1.bf16.msra.mxu0 0
        %1780 = vmatprep.subr.bf16.mxu0 0
        %1781 = vmatpush1.bf16.msra.mxu0 0
        %1782 = vmatprep.subr.bf16.mxu0 0
        %1783 = vmatpush1.bf16.msra.mxu0 0
        %1784 = vmatprep.subr.bf16.mxu0 0
        %1785 = vmatpush1.bf16.msra.mxu0 0
        %1786 = vmatprep.subr.bf16.mxu0 0
        %1787 = vmatpush1.bf16.msra.mxu0 0
        %1788 = vmatprep.subr.bf16.mxu0 0
        %1789 = vmatpush1.bf16.msra.mxu0 0
        %1790 = vmatprep.subr.bf16.mxu0 0
        %1791 = vmatpush1.bf16.msra.mxu0 0
        %1792 = vmatprep.subr.bf16.mxu0 0
        %1793 = vmatpush1.bf16.msra.mxu0 %v1776
        %1794 = vmatprep.subr.bf16.mxu0 0
        %1795 = vmatpush2.bf16.msra.mxu0 0
        %1796 = vmatprep.subr.bf16.mxu0 0
        %1797 = vmatpush2.bf16.msra.mxu0 0
        %1798 = vmatprep.subr.bf16.mxu0 0
        %1799 = vmatpush2.bf16.msra.mxu0 0
        %1800 = vmatprep.subr.bf16.mxu0 0
        %1801 = vmatpush2.bf16.msra.mxu0 0
        %1802 = vmatprep.subr.bf16.mxu0 0
        %1803 = vmatpush2.bf16.msra.mxu0 0
        %1804 = vmatprep.subr.bf16.mxu0 0
        %1805 = vmatpush2.bf16.msra.mxu0 0
        %1806 = vmatprep.subr.bf16.mxu0 0
        %1807 = vmatpush2.bf16.msra.mxu0 0
        %1808 = vmatprep.subr.bf16.mxu0 0
        %1809 = vmatpush2.bf16.msra.mxu0 0
        %1810 = vmatprep.mubr.bf16.mxu0 0
        %1811 = vmatmul.mubr.bf16.gmra.mxu0 %v1773
        %v1812 = vpop.f32.mrf.mxu0
        %v1813 = vadd.f32 %v1632, %v1812
        %v1814 = vpop.f32.mrf.mxu0
        %v1815 = vpop.f32.mrf.mxu0
        %v1816 = vpop.f32.mrf.mxu0
        %1817 = vdwg.mxu0
        %v1819 = vsel %vm669, %v1598, 0
        %v1822 = vsel %vm673, %v1614, 0
        %1824 = vmatprep.subr.bf16.mxu0 0
        %1825 = vmatpush1.bf16.msra.mxu0 0
        %1826 = vmatprep.subr.bf16.mxu0 0
        %1827 = vmatpush1.bf16.msra.mxu0 0
        %1828 = vmatprep.subr.bf16.mxu0 0
        %1829 = vmatpush1.bf16.msra.mxu0 0
        %1830 = vmatprep.subr.bf16.mxu0 0
        %1831 = vmatpush1.bf16.msra.mxu0 0
        %1832 = vmatprep.subr.bf16.mxu0 0
        %1833 = vmatpush1.bf16.msra.mxu0 0
        %1834 = vmatprep.subr.bf16.mxu0 0
        %1835 = vmatpush1.bf16.msra.mxu0 0
        %1836 = vmatprep.subr.bf16.mxu0 0
        %1837 = vmatpush1.bf16.msra.mxu0 0
        %1838 = vmatprep.subr.bf16.mxu0 0
        %1839 = vmatpush1.bf16.msra.mxu0 %v1822
        %1840 = vmatprep.subr.bf16.mxu0 0
        %1841 = vmatpush2.bf16.msra.mxu0 0
        %1842 = vmatprep.subr.bf16.mxu0 0
        %1843 = vmatpush2.bf16.msra.mxu0 0
        %1844 = vmatprep.subr.bf16.mxu0 0
        %1845 = vmatpush2.bf16.msra.mxu0 0
        %1846 = vmatprep.subr.bf16.mxu0 0
        %1847 = vmatpush2.bf16.msra.mxu0 0
        %1848 = vmatprep.subr.bf16.mxu0 0
        %1849 = vmatpush2.bf16.msra.mxu0 0
        %1850 = vmatprep.subr.bf16.mxu0 0
        %1851 = vmatpush2.bf16.msra.mxu0 0
        %1852 = vmatprep.subr.bf16.mxu0 0
        %1853 = vmatpush2.bf16.msra.mxu0 0
        %1854 = vmatprep.subr.bf16.mxu0 0
        %1855 = vmatpush2.bf16.msra.mxu0 0
        %1856 = vmatprep.mubr.bf16.mxu0 0
        %1857 = vmatmul.mubr.bf16.gmra.mxu0 %v1819
        %v1858 = vpop.f32.mrf.mxu0
        %v1859 = vadd.f32 %v1632, %v1858
        %v1860 = vpop.f32.mrf.mxu0
        %v1861 = vpop.f32.mrf.mxu0
        %v1862 = vpop.f32.mrf.mxu0
        %1863 = vdwg.mxu0
        %v1865 = vsel %vm669, %v1599, 0
        %v1868 = vsel %vm673, %v1615, 0
        %1870 = vmatprep.subr.bf16.mxu0 0
        %1871 = vmatpush1.bf16.msra.mxu0 0
        %1872 = vmatprep.subr.bf16.mxu0 0
        %1873 = vmatpush1.bf16.msra.mxu0 0
        %1874 = vmatprep.subr.bf16.mxu0 0
        %1875 = vmatpush1.bf16.msra.mxu0 0
        %1876 = vmatprep.subr.bf16.mxu0 0
        %1877 = vmatpush1.bf16.msra.mxu0 0
        %1878 = vmatprep.subr.bf16.mxu0 0
        %1879 = vmatpush1.bf16.msra.mxu0 0
        %1880 = vmatprep.subr.bf16.mxu0 0
        %1881 = vmatpush1.bf16.msra.mxu0 0
        %1882 = vmatprep.subr.bf16.mxu0 0
        %1883 = vmatpush1.bf16.msra.mxu0 0
        %1884 = vmatprep.subr.bf16.mxu0 0
        %1885 = vmatpush1.bf16.msra.mxu0 %v1868
        %1886 = vmatprep.subr.bf16.mxu0 0
        %1887 = vmatpush2.bf16.msra.mxu0 0
        %1888 = vmatprep.subr.bf16.mxu0 0
        %1889 = vmatpush2.bf16.msra.mxu0 0
        %1890 = vmatprep.subr.bf16.mxu0 0
        %1891 = vmatpush2.bf16.msra.mxu0 0
        %1892 = vmatprep.subr.bf16.mxu0 0
        %1893 = vmatpush2.bf16.msra.mxu0 0
        %1894 = vmatprep.subr.bf16.mxu0 0
        %1895 = vmatpush2.bf16.msra.mxu0 0
        %1896 = vmatprep.subr.bf16.mxu0 0
        %1897 = vmatpush2.bf16.msra.mxu0 0
        %1898 = vmatprep.subr.bf16.mxu0 0
        %1899 = vmatpush2.bf16.msra.mxu0 0
        %1900 = vmatprep.subr.bf16.mxu0 0
        %1901 = vmatpush2.bf16.msra.mxu0 0
        %1902 = vmatprep.mubr.bf16.mxu0 0
        %1903 = vmatmul.mubr.bf16.gmra.mxu0 %v1865
        %v1904 = vpop.f32.mrf.mxu0
        %v1905 = vadd.f32 %v1632, %v1904
        %v1906 = vpop.f32.mrf.mxu0
        %v1907 = vpop.f32.mrf.mxu0
        %v1908 = vpop.f32.mrf.mxu0
        %1909 = vdwg.mxu0
        %v1911 = vsel %vm669, %v1600, 0
        %v1914 = vsel %vm673, %v1616, 0
        %1916 = vmatprep.subr.bf16.mxu0 0
        %1917 = vmatpush1.bf16.msra.mxu0 0
        %1918 = vmatprep.subr.bf16.mxu0 0
        %1919 = vmatpush1.bf16.msra.mxu0 0
        %1920 = vmatprep.subr.bf16.mxu0 0
        %1921 = vmatpush1.bf16.msra.mxu0 0
        %1922 = vmatprep.subr.bf16.mxu0 0
        %1923 = vmatpush1.bf16.msra.mxu0 0
        %1924 = vmatprep.subr.bf16.mxu0 0
        %1925 = vmatpush1.bf16.msra.mxu0 0
        %1926 = vmatprep.subr.bf16.mxu0 0
        %1927 = vmatpush1.bf16.msra.mxu0 0
        %1928 = vmatprep.subr.bf16.mxu0 0
        %1929 = vmatpush1.bf16.msra.mxu0 0
        %1930 = vmatprep.subr.bf16.mxu0 0
        %1931 = vmatpush1.bf16.msra.mxu0 %v1914
        %1932 = vmatprep.subr.bf16.mxu0 0
        %1933 = vmatpush2.bf16.msra.mxu0 0
        %1934 = vmatprep.subr.bf16.mxu0 0
        %1935 = vmatpush2.bf16.msra.mxu0 0
        %1936 = vmatprep.subr.bf16.mxu0 0
        %1937 = vmatpush2.bf16.msra.mxu0 0
        %1938 = vmatprep.subr.bf16.mxu0 0
        %1939 = vmatpush2.bf16.msra.mxu0 0
        %1940 = vmatprep.subr.bf16.mxu0 0
        %1941 = vmatpush2.bf16.msra.mxu0 0
        %1942 = vmatprep.subr.bf16.mxu0 0
        %1943 = vmatpush2.bf16.msra.mxu0 0
        %1944 = vmatprep.subr.bf16.mxu0 0
        %1945 = vmatpush2.bf16.msra.mxu0 0
        %1946 = vmatprep.subr.bf16.mxu0 0
        %1947 = vmatpush2.bf16.msra.mxu0 0
        %1948 = vmatprep.mubr.bf16.mxu0 0
        %1949 = vmatmul.mubr.bf16.gmra.mxu0 %v1911
        %v1950 = vpop.f32.mrf.mxu0
        %v1951 = vadd.f32 %v1632, %v1950
        %v1952 = vpop.f32.mrf.mxu0
        %v1953 = vpop.f32.mrf.mxu0
        %v1954 = vpop.f32.mrf.mxu0
        %1955 = vdwg.mxu0
        %v1957 = vsel %vm669, %v1601, 0
        %v1960 = vsel %vm673, %v1617, 0
        %1962 = vmatprep.subr.bf16.mxu0 0
        %1963 = vmatpush1.bf16.msra.mxu0 0
        %1964 = vmatprep.subr.bf16.mxu0 0
        %1965 = vmatpush1.bf16.msra.mxu0 0
        %1966 = vmatprep.subr.bf16.mxu0 0
        %1967 = vmatpush1.bf16.msra.mxu0 0
        %1968 = vmatprep.subr.bf16.mxu0 0
        %1969 = vmatpush1.bf16.msra.mxu0 0
        %1970 = vmatprep.subr.bf16.mxu0 0
        %1971 = vmatpush1.bf16.msra.mxu0 0
        %1972 = vmatprep.subr.bf16.mxu0 0
        %1973 = vmatpush1.bf16.msra.mxu0 0
        %1974 = vmatprep.subr.bf16.mxu0 0
        %1975 = vmatpush1.bf16.msra.mxu0 0
        %1976 = vmatprep.subr.bf16.mxu0 0
        %1977 = vmatpush1.bf16.msra.mxu0 %v1960
        %1978 = vmatprep.subr.bf16.mxu0 0
        %1979 = vmatpush2.bf16.msra.mxu0 0
        %1980 = vmatprep.subr.bf16.mxu0 0
        %1981 = vmatpush2.bf16.msra.mxu0 0
        %1982 = vmatprep.subr.bf16.mxu0 0
        %1983 = vmatpush2.bf16.msra.mxu0 0
        %1984 = vmatprep.subr.bf16.mxu0 0
        %1985 = vmatpush2.bf16.msra.mxu0 0
        %1986 = vmatprep.subr.bf16.mxu0 0
        %1987 = vmatpush2.bf16.msra.mxu0 0
        %1988 = vmatprep.subr.bf16.mxu0 0
        %1989 = vmatpush2.bf16.msra.mxu0 0
        %1990 = vmatprep.subr.bf16.mxu0 0
        %1991 = vmatpush2.bf16.msra.mxu0 0
        %1992 = vmatprep.subr.bf16.mxu0 0
        %1993 = vmatpush2.bf16.msra.mxu0 0
        %1994 = vmatprep.mubr.bf16.mxu0 0
        %1995 = vmatmul.mubr.bf16.gmra.mxu0 %v1957
        %v1996 = vpop.f32.mrf.mxu0
        %v1997 = vadd.f32 %v1632, %v1996
        %v1998 = vpop.f32.mrf.mxu0
        %v1999 = vpop.f32.mrf.mxu0
        %v2000 = vpop.f32.mrf.mxu0
        %2001 = vdwg.mxu0
        %v2003 = vsel %vm669, %v1602, 0
        %v2006 = vsel %vm673, %v1618, 0
        %2008 = vmatprep.subr.bf16.mxu0 0
        %2009 = vmatpush1.bf16.msra.mxu0 0
        %2010 = vmatprep.subr.bf16.mxu0 0
        %2011 = vmatpush1.bf16.msra.mxu0 0
        %2012 = vmatprep.subr.bf16.mxu0 0
        %2013 = vmatpush1.bf16.msra.mxu0 0
        %2014 = vmatprep.subr.bf16.mxu0 0
        %2015 = vmatpush1.bf16.msra.mxu0 0
        %2016 = vmatprep.subr.bf16.mxu0 0
        %2017 = vmatpush1.bf16.msra.mxu0 0
        %2018 = vmatprep.subr.bf16.mxu0 0
        %2019 = vmatpush1.bf16.msra.mxu0 0
        %2020 = vmatprep.subr.bf16.mxu0 0
        %2021 = vmatpush1.bf16.msra.mxu0 0
        %2022 = vmatprep.subr.bf16.mxu0 0
        %2023 = vmatpush1.bf16.msra.mxu0 %v2006
        %2024 = vmatprep.subr.bf16.mxu0 0
        %2025 = vmatpush2.bf16.msra.mxu0 0
        %2026 = vmatprep.subr.bf16.mxu0 0
        %2027 = vmatpush2.bf16.msra.mxu0 0
        %2028 = vmatprep.subr.bf16.mxu0 0
        %2029 = vmatpush2.bf16.msra.mxu0 0
        %2030 = vmatprep.subr.bf16.mxu0 0
        %2031 = vmatpush2.bf16.msra.mxu0 0
        %2032 = vmatprep.subr.bf16.mxu0 0
        %2033 = vmatpush2.bf16.msra.mxu0 0
        %2034 = vmatprep.subr.bf16.mxu0 0
        %2035 = vmatpush2.bf16.msra.mxu0 0
        %2036 = vmatprep.subr.bf16.mxu0 0
        %2037 = vmatpush2.bf16.msra.mxu0 0
        %2038 = vmatprep.subr.bf16.mxu0 0
        %2039 = vmatpush2.bf16.msra.mxu0 0
        %2040 = vmatprep.mubr.bf16.mxu0 0
        %2041 = vmatmul.mubr.bf16.gmra.mxu0 %v2003
        %v2042 = vpop.f32.mrf.mxu0
        %v2043 = vadd.f32 %v1632, %v2042
        %v2044 = vpop.f32.mrf.mxu0
        %v2045 = vpop.f32.mrf.mxu0
        %v2046 = vpop.f32.mrf.mxu0
        %2047 = vdwg.mxu0
        %v2049 = vsel %vm669, %v1603, 0
        %v2052 = vsel %vm673, %v1619, 0
        %2054 = vmatprep.subr.bf16.mxu0 0
        %2055 = vmatpush1.bf16.msra.mxu0 0
        %2056 = vmatprep.subr.bf16.mxu0 0
        %2057 = vmatpush1.bf16.msra.mxu0 0
        %2058 = vmatprep.subr.bf16.mxu0 0
        %2059 = vmatpush1.bf16.msra.mxu0 0
        %2060 = vmatprep.subr.bf16.mxu0 0
        %2061 = vmatpush1.bf16.msra.mxu0 0
        %2062 = vmatprep.subr.bf16.mxu0 0
        %2063 = vmatpush1.bf16.msra.mxu0 0
        %2064 = vmatprep.subr.bf16.mxu0 0
        %2065 = vmatpush1.bf16.msra.mxu0 0
        %2066 = vmatprep.subr.bf16.mxu0 0
        %2067 = vmatpush1.bf16.msra.mxu0 0
        %2068 = vmatprep.subr.bf16.mxu0 0
        %2069 = vmatpush1.bf16.msra.mxu0 %v2052
        %2070 = vmatprep.subr.bf16.mxu0 0
        %2071 = vmatpush2.bf16.msra.mxu0 0
        %2072 = vmatprep.subr.bf16.mxu0 0
        %2073 = vmatpush2.bf16.msra.mxu0 0
        %2074 = vmatprep.subr.bf16.mxu0 0
        %2075 = vmatpush2.bf16.msra.mxu0 0
        %2076 = vmatprep.subr.bf16.mxu0 0
        %2077 = vmatpush2.bf16.msra.mxu0 0
        %2078 = vmatprep.subr.bf16.mxu0 0
        %2079 = vmatpush2.bf16.msra.mxu0 0
        %2080 = vmatprep.subr.bf16.mxu0 0
        %2081 = vmatpush2.bf16.msra.mxu0 0
        %2082 = vmatprep.subr.bf16.mxu0 0
        %2083 = vmatpush2.bf16.msra.mxu0 0
        %2084 = vmatprep.subr.bf16.mxu0 0
        %2085 = vmatpush2.bf16.msra.mxu0 0
        %2086 = vmatprep.mubr.bf16.mxu0 0
        %2087 = vmatmul.mubr.bf16.gmra.mxu0 %v2049
        %v2088 = vpop.f32.mrf.mxu0
        %v2089 = vadd.f32 %v1632, %v2088
        %v2090 = vpop.f32.mrf.mxu0
        %v2091 = vpop.f32.mrf.mxu0
        %v2092 = vpop.f32.mrf.mxu0
        %2093 = vdwg.mxu0
        %v2095 = vsel %vm669, %v1604, 0
        %v2098 = vsel %vm673, %v1620, 0
        %2100 = vmatprep.subr.bf16.mxu0 0
        %2101 = vmatpush1.bf16.msra.mxu0 0
        %2102 = vmatprep.subr.bf16.mxu0 0
        %2103 = vmatpush1.bf16.msra.mxu0 0
        %2104 = vmatprep.subr.bf16.mxu0 0
        %2105 = vmatpush1.bf16.msra.mxu0 0
        %2106 = vmatprep.subr.bf16.mxu0 0
        %2107 = vmatpush1.bf16.msra.mxu0 0
        %2108 = vmatprep.subr.bf16.mxu0 0
        %2109 = vmatpush1.bf16.msra.mxu0 0
        %2110 = vmatprep.subr.bf16.mxu0 0
        %2111 = vmatpush1.bf16.msra.mxu0 0
        %2112 = vmatprep.subr.bf16.mxu0 0
        %2113 = vmatpush1.bf16.msra.mxu0 0
        %2114 = vmatprep.subr.bf16.mxu0 0
        %2115 = vmatpush1.bf16.msra.mxu0 %v2098
        %2116 = vmatprep.subr.bf16.mxu0 0
        %2117 = vmatpush2.bf16.msra.mxu0 0
        %2118 = vmatprep.subr.bf16.mxu0 0
        %2119 = vmatpush2.bf16.msra.mxu0 0
        %2120 = vmatprep.subr.bf16.mxu0 0
        %2121 = vmatpush2.bf16.msra.mxu0 0
        %2122 = vmatprep.subr.bf16.mxu0 0
        %2123 = vmatpush2.bf16.msra.mxu0 0
        %2124 = vmatprep.subr.bf16.mxu0 0
        %2125 = vmatpush2.bf16.msra.mxu0 0
        %2126 = vmatprep.subr.bf16.mxu0 0
        %2127 = vmatpush2.bf16.msra.mxu0 0
        %2128 = vmatprep.subr.bf16.mxu0 0
        %2129 = vmatpush2.bf16.msra.mxu0 0
        %2130 = vmatprep.subr.bf16.mxu0 0
        %2131 = vmatpush2.bf16.msra.mxu0 0
        %2132 = vmatprep.mubr.bf16.mxu0 0
        %2133 = vmatmul.mubr.bf16.gmra.mxu0 %v2095
        %v2134 = vpop.f32.mrf.mxu0
        %v2135 = vadd.f32 %v1632, %v2134
        %v2136 = vpop.f32.mrf.mxu0
        %v2137 = vpop.f32.mrf.mxu0
        %v2138 = vpop.f32.mrf.mxu0
        %2139 = vdwg.mxu0
        %v2141 = vsel %vm669, %v1605, 0
        %v2144 = vsel %vm673, %v1621, 0
        %2146 = vmatprep.subr.bf16.mxu0 0
        %2147 = vmatpush1.bf16.msra.mxu0 0
        %2148 = vmatprep.subr.bf16.mxu0 0
        %2149 = vmatpush1.bf16.msra.mxu0 0
        %2150 = vmatprep.subr.bf16.mxu0 0
        %2151 = vmatpush1.bf16.msra.mxu0 0
        %2152 = vmatprep.subr.bf16.mxu0 0
        %2153 = vmatpush1.bf16.msra.mxu0 0
        %2154 = vmatprep.subr.bf16.mxu0 0
        %2155 = vmatpush1.bf16.msra.mxu0 0
        %2156 = vmatprep.subr.bf16.mxu0 0
        %2157 = vmatpush1.bf16.msra.mxu0 0
        %2158 = vmatprep.subr.bf16.mxu0 0
        %2159 = vmatpush1.bf16.msra.mxu0 0
        %2160 = vmatprep.subr.bf16.mxu0 0
        %2161 = vmatpush1.bf16.msra.mxu0 %v2144
        %2162 = vmatprep.subr.bf16.mxu0 0
        %2163 = vmatpush2.bf16.msra.mxu0 0
        %2164 = vmatprep.subr.bf16.mxu0 0
        %2165 = vmatpush2.bf16.msra.mxu0 0
        %2166 = vmatprep.subr.bf16.mxu0 0
        %2167 = vmatpush2.bf16.msra.mxu0 0
        %2168 = vmatprep.subr.bf16.mxu0 0
        %2169 = vmatpush2.bf16.msra.mxu0 0
        %2170 = vmatprep.subr.bf16.mxu0 0
        %2171 = vmatpush2.bf16.msra.mxu0 0
        %2172 = vmatprep.subr.bf16.mxu0 0
        %2173 = vmatpush2.bf16.msra.mxu0 0
        %2174 = vmatprep.subr.bf16.mxu0 0
        %2175 = vmatpush2.bf16.msra.mxu0 0
        %2176 = vmatprep.subr.bf16.mxu0 0
        %2177 = vmatpush2.bf16.msra.mxu0 0
        %2178 = vmatprep.mubr.bf16.mxu0 0
        %2179 = vmatmul.mubr.bf16.gmra.mxu0 %v2141
        %v2180 = vpop.f32.mrf.mxu0
        %v2181 = vadd.f32 %v1632, %v2180
        %v2182 = vpop.f32.mrf.mxu0
        %v2183 = vpop.f32.mrf.mxu0
        %v2184 = vpop.f32.mrf.mxu0
        %2185 = vdwg.mxu0
        %v2187 = vsel %vm669, %v1606, 0
        %v2190 = vsel %vm673, %v1622, 0
        %2192 = vmatprep.subr.bf16.mxu0 0
        %2193 = vmatpush1.bf16.msra.mxu0 0
        %2194 = vmatprep.subr.bf16.mxu0 0
        %2195 = vmatpush1.bf16.msra.mxu0 0
        %2196 = vmatprep.subr.bf16.mxu0 0
        %2197 = vmatpush1.bf16.msra.mxu0 0
        %2198 = vmatprep.subr.bf16.mxu0 0
        %2199 = vmatpush1.bf16.msra.mxu0 0
        %2200 = vmatprep.subr.bf16.mxu0 0
        %2201 = vmatpush1.bf16.msra.mxu0 0
        %2202 = vmatprep.subr.bf16.mxu0 0
        %2203 = vmatpush1.bf16.msra.mxu0 0
        %2204 = vmatprep.subr.bf16.mxu0 0
        %2205 = vmatpush1.bf16.msra.mxu0 0
        %2206 = vmatprep.subr.bf16.mxu0 0
        %2207 = vmatpush1.bf16.msra.mxu0 %v2190
        %2208 = vmatprep.subr.bf16.mxu0 0
        %2209 = vmatpush2.bf16.msra.mxu0 0
        %2210 = vmatprep.subr.bf16.mxu0 0
        %2211 = vmatpush2.bf16.msra.mxu0 0
        %2212 = vmatprep.subr.bf16.mxu0 0
        %2213 = vmatpush2.bf16.msra.mxu0 0
        %2214 = vmatprep.subr.bf16.mxu0 0
        %2215 = vmatpush2.bf16.msra.mxu0 0
        %2216 = vmatprep.subr.bf16.mxu0 0
        %2217 = vmatpush2.bf16.msra.mxu0 0
        %2218 = vmatprep.subr.bf16.mxu0 0
        %2219 = vmatpush2.bf16.msra.mxu0 0
        %2220 = vmatprep.subr.bf16.mxu0 0
        %2221 = vmatpush2.bf16.msra.mxu0 0
        %2222 = vmatprep.subr.bf16.mxu0 0
        %2223 = vmatpush2.bf16.msra.mxu0 0
        %2224 = vmatprep.mubr.bf16.mxu0 0
        %2225 = vmatmul.mubr.bf16.gmra.mxu0 %v2187
        %v2226 = vpop.f32.mrf.mxu0
        %v2227 = vadd.f32 %v1632, %v2226
        %v2228 = vpop.f32.mrf.mxu0
        %v2229 = vpop.f32.mrf.mxu0
        %v2230 = vpop.f32.mrf.mxu0
        %2231 = vdwg.mxu0
        %v2233 = vsel %vm669, %v1607, 0
        %v2236 = vsel %vm673, %v1623, 0
        %2238 = vmatprep.subr.bf16.mxu0 0
        %2239 = vmatpush1.bf16.msra.mxu0 0
        %2240 = vmatprep.subr.bf16.mxu0 0
        %2241 = vmatpush1.bf16.msra.mxu0 0
        %2242 = vmatprep.subr.bf16.mxu0 0
        %2243 = vmatpush1.bf16.msra.mxu0 0
        %2244 = vmatprep.subr.bf16.mxu0 0
        %2245 = vmatpush1.bf16.msra.mxu0 0
        %2246 = vmatprep.subr.bf16.mxu0 0
        %2247 = vmatpush1.bf16.msra.mxu0 0
        %2248 = vmatprep.subr.bf16.mxu0 0
        %2249 = vmatpush1.bf16.msra.mxu0 0
        %2250 = vmatprep.subr.bf16.mxu0 0
        %2251 = vmatpush1.bf16.msra.mxu0 0
        %2252 = vmatprep.subr.bf16.mxu0 0
        %2253 = vmatpush1.bf16.msra.mxu0 %v2236
        %2254 = vmatprep.subr.bf16.mxu0 0
        %2255 = vmatpush2.bf16.msra.mxu0 0
        %2256 = vmatprep.subr.bf16.mxu0 0
        %2257 = vmatpush2.bf16.msra.mxu0 0
        %2258 = vmatprep.subr.bf16.mxu0 0
        %2259 = vmatpush2.bf16.msra.mxu0 0
        %2260 = vmatprep.subr.bf16.mxu0 0
        %2261 = vmatpush2.bf16.msra.mxu0 0
        %2262 = vmatprep.subr.bf16.mxu0 0
        %2263 = vmatpush2.bf16.msra.mxu0 0
        %2264 = vmatprep.subr.bf16.mxu0 0
        %2265 = vmatpush2.bf16.msra.mxu0 0
        %2266 = vmatprep.subr.bf16.mxu0 0
        %2267 = vmatpush2.bf16.msra.mxu0 0
        %2268 = vmatprep.subr.bf16.mxu0 0
        %2269 = vmatpush2.bf16.msra.mxu0 0
        %2270 = vmatprep.mubr.bf16.mxu0 0
        %2271 = vmatmul.mubr.bf16.gmra.mxu0 %v2233
        %v2272 = vpop.f32.mrf.mxu0
        %v2273 = vadd.f32 %v1632, %v2272
        %v2274 = vpop.f32.mrf.mxu0
        %v2275 = vpop.f32.mrf.mxu0
        %v2276 = vpop.f32.mrf.mxu0
        %2277 = vdwg.mxu0
        %v2279 = vsel %vm669, %v1608, 0
        %v2282 = vsel %vm673, %v1624, 0
        %2284 = vmatprep.subr.bf16.mxu0 0
        %2285 = vmatpush1.bf16.msra.mxu0 0
        %2286 = vmatprep.subr.bf16.mxu0 0
        %2287 = vmatpush1.bf16.msra.mxu0 0
        %2288 = vmatprep.subr.bf16.mxu0 0
        %2289 = vmatpush1.bf16.msra.mxu0 0
        %2290 = vmatprep.subr.bf16.mxu0 0
        %2291 = vmatpush1.bf16.msra.mxu0 0
        %2292 = vmatprep.subr.bf16.mxu0 0
        %2293 = vmatpush1.bf16.msra.mxu0 0
        %2294 = vmatprep.subr.bf16.mxu0 0
        %2295 = vmatpush1.bf16.msra.mxu0 0
        %2296 = vmatprep.subr.bf16.mxu0 0
        %2297 = vmatpush1.bf16.msra.mxu0 0
        %2298 = vmatprep.subr.bf16.mxu0 0
        %2299 = vmatpush1.bf16.msra.mxu0 %v2282
        %2300 = vmatprep.subr.bf16.mxu0 0
        %2301 = vmatpush2.bf16.msra.mxu0 0
        %2302 = vmatprep.subr.bf16.mxu0 0
        %2303 = vmatpush2.bf16.msra.mxu0 0
        %2304 = vmatprep.subr.bf16.mxu0 0
        %2305 = vmatpush2.bf16.msra.mxu0 0
        %2306 = vmatprep.subr.bf16.mxu0 0
        %2307 = vmatpush2.bf16.msra.mxu0 0
        %2308 = vmatprep.subr.bf16.mxu0 0
        %2309 = vmatpush2.bf16.msra.mxu0 0
        %2310 = vmatprep.subr.bf16.mxu0 0
        %2311 = vmatpush2.bf16.msra.mxu0 0
        %2312 = vmatprep.subr.bf16.mxu0 0
        %2313 = vmatpush2.bf16.msra.mxu0 0
        %2314 = vmatprep.subr.bf16.mxu0 0
        %2315 = vmatpush2.bf16.msra.mxu0 0
        %2316 = vmatprep.mubr.bf16.mxu0 0
        %2317 = vmatmul.mubr.bf16.gmra.mxu0 %v2279
        %v2318 = vpop.f32.mrf.mxu0
        %v2319 = vadd.f32 %v1632, %v2318
        %v2320 = vpop.f32.mrf.mxu0
        %v2321 = vpop.f32.mrf.mxu0
        %v2322 = vpop.f32.mrf.mxu0
        %2323 = vdwg.mxu0
        %v2325 = vsel %vm669, %v1609, 0
        %v2328 = vsel %vm673, %v1625, 0
        %2330 = vmatprep.subr.bf16.mxu0 0
        %2331 = vmatpush1.bf16.msra.mxu0 0
        %2332 = vmatprep.subr.bf16.mxu0 0
        %2333 = vmatpush1.bf16.msra.mxu0 0
        %2334 = vmatprep.subr.bf16.mxu0 0
        %2335 = vmatpush1.bf16.msra.mxu0 0
        %2336 = vmatprep.subr.bf16.mxu0 0
        %2337 = vmatpush1.bf16.msra.mxu0 0
        %2338 = vmatprep.subr.bf16.mxu0 0
        %2339 = vmatpush1.bf16.msra.mxu0 0
        %2340 = vmatprep.subr.bf16.mxu0 0
        %2341 = vmatpush1.bf16.msra.mxu0 0
        %2342 = vmatprep.subr.bf16.mxu0 0
        %2343 = vmatpush1.bf16.msra.mxu0 0
        %2344 = vmatprep.subr.bf16.mxu0 0
        %2345 = vmatpush1.bf16.msra.mxu0 %v2328
        %2346 = vmatprep.subr.bf16.mxu0 0
        %2347 = vmatpush2.bf16.msra.mxu0 0
        %2348 = vmatprep.subr.bf16.mxu0 0
        %2349 = vmatpush2.bf16.msra.mxu0 0
        %2350 = vmatprep.subr.bf16.mxu0 0
        %2351 = vmatpush2.bf16.msra.mxu0 0
        %2352 = vmatprep.subr.bf16.mxu0 0
        %2353 = vmatpush2.bf16.msra.mxu0 0
        %2354 = vmatprep.subr.bf16.mxu0 0
        %2355 = vmatpush2.bf16.msra.mxu0 0
        %2356 = vmatprep.subr.bf16.mxu0 0
        %2357 = vmatpush2.bf16.msra.mxu0 0
        %2358 = vmatprep.subr.bf16.mxu0 0
        %2359 = vmatpush2.bf16.msra.mxu0 0
        %2360 = vmatprep.subr.bf16.mxu0 0
        %2361 = vmatpush2.bf16.msra.mxu0 0
        %2362 = vmatprep.mubr.bf16.mxu0 0
        %2363 = vmatmul.mubr.bf16.gmra.mxu0 %v2325
        %v2364 = vpop.f32.mrf.mxu0
        %v2365 = vadd.f32 %v1632, %v2364
        %v2366 = vpop.f32.mrf.mxu0
        %v2367 = vpop.f32.mrf.mxu0
        %v2368 = vpop.f32.mrf.mxu0
        %2369 = vdwg.mxu0
        %v2370 = vmax.f32 %v1675, 0.0
        %v2371 = vmax.f32 %v1721, 0.0
        %v2372 = vmax.f32 %v1767, 0.0
        %v2373 = vmax.f32 %v1813, 0.0
        %v2374 = vmax.f32 %v1859, 0.0
        %v2375 = vmax.f32 %v1905, 0.0
        %v2376 = vmax.f32 %v1951, 0.0
        %v2377 = vmax.f32 %v1997, 0.0
        %v2378 = vmax.f32 %v2043, 0.0
        %v2379 = vmax.f32 %v2089, 0.0
        %v2380 = vmax.f32 %v2135, 0.0
        %v2381 = vmax.f32 %v2181, 0.0
        %v2382 = vmax.f32 %v2227, 0.0
        %v2383 = vmax.f32 %v2273, 0.0
        %v2384 = vmax.f32 %v2319, 0.0
        %v2385 = vmax.f32 %v2365, 0.0
        %v2386 = vpack.c.bf16 %v2371, %v2370
        %v2387 = vpack.c.bf16 %v2373, %v2372
        %v2388 = vpack.c.bf16 %v2375, %v2374
        %v2389 = vpack.c.bf16 %v2377, %v2376
        %v2390 = vpack.c.bf16 %v2379, %v2378
        %v2391 = vpack.c.bf16 %v2381, %v2380
        %v2392 = vpack.c.bf16 %v2383, %v2382
        %v2393 = vpack.c.bf16 %v2385, %v2384
        %v2394 = vld [vmem:[%s4] sm:$0xf]
        %v2395 = vld [vmem:[%s4 + $0x4] sm:$0xf]
        %v2396 = vld [vmem:[%s4 + $0x8] sm:$0xf]
        %v2397 = vld [vmem:[%s4 + $0xc] sm:$0xf]
        %v2398 = vld [vmem:[%s4 + $0x10] sm:$0xf]
        %v2399 = vld [vmem:[%s4 + $0x14] sm:$0xf]
        %v2400 = vld [vmem:[%s4 + $0x18] sm:$0xf]
        %v2401 = vld [vmem:[%s4 + $0x1c] sm:$0xf]
        %v2402 = vld [vmem:[%s4 + $0x20] sm:$0xf]
        %v2403 = vld [vmem:[%s4 + $0x24] sm:$0xf]
        %v2404 = vld [vmem:[%s4 + $0x28] sm:$0xf]
        %v2405 = vld [vmem:[%s4 + $0x2c] sm:$0xf]
        %v2406 = vld [vmem:[%s4 + $0x30] sm:$0xf]
        %v2407 = vld [vmem:[%s4 + $0x34] sm:$0xf]
        %v2408 = vld [vmem:[%s4 + $0x38] sm:$0xf]
        %v2409 = vld [vmem:[%s4 + $0x3c] sm:$0xf]
        %v2426 = vunpack.c.l.b16 %v2394
        %v2427 = vunpack.c.l.b16 %v2395
        %v2428 = vunpack.c.l.b16 %v2396
        %v2429 = vunpack.c.l.b16 %v2397
        %v2430 = vunpack.c.l.b16 %v2398
        %v2431 = vunpack.c.l.b16 %v2399
        %v2432 = vunpack.c.l.b16 %v2400
        %v2433 = vunpack.c.l.b16 %v2401
        %v2434 = vunpack.c.l.b16 %v2402
        %v2435 = vunpack.c.l.b16 %v2403
        %v2436 = vunpack.c.l.b16 %v2404
        %v2437 = vunpack.c.l.b16 %v2405
        %v2438 = vunpack.c.l.b16 %v2406
        %v2439 = vunpack.c.l.b16 %v2407
        %v2440 = vunpack.c.l.b16 %v2408
        %v2441 = vunpack.c.l.b16 %v2409
        %v2442 = vpack.c.b16 %v2427, %v2426
        %v2443 = vpack.c.b16 %v2429, %v2428
        %v2444 = vpack.c.b16 %v2431, %v2430
        %v2445 = vpack.c.b16 %v2433, %v2432
        %v2446 = vpack.c.b16 %v2435, %v2434
        %v2447 = vpack.c.b16 %v2437, %v2436
        %v2448 = vpack.c.b16 %v2439, %v2438
        %v2449 = vpack.c.b16 %v2441, %v2440
        %2458 = vmatprep.subr.bf16.mxu0 0
        %2459 = vmatpush1.bf16.msra.mxu0 %v2449
        %2460 = vmatprep.subr.bf16.mxu0 0
        %2461 = vmatpush1.bf16.msra.mxu0 %v2448
        %2462 = vmatprep.subr.bf16.mxu0 0
        %2463 = vmatpush1.bf16.msra.mxu0 %v2447
        %2464 = vmatprep.subr.bf16.mxu0 0
        %2465 = vmatpush1.bf16.msra.mxu0 %v2446
        %2466 = vmatprep.subr.bf16.mxu0 0
        %2467 = vmatpush1.bf16.msra.mxu0 %v2445
        %2468 = vmatprep.subr.bf16.mxu0 0
        %2469 = vmatpush1.bf16.msra.mxu0 %v2444
        %2470 = vmatprep.subr.bf16.mxu0 0
        %2471 = vmatpush1.bf16.msra.mxu0 %v2443
        %2472 = vmatprep.subr.bf16.mxu0 0
        %2473 = vmatpush1.bf16.msra.mxu0 %v2442
        %2474 = vmatprep.subr.bf16.mxu0 0
        %2475 = vmatpush2.bf16.msra.mxu0 0
        %2476 = vmatprep.subr.bf16.mxu0 0
        %2477 = vmatpush2.bf16.msra.mxu0 0
        %2478 = vmatprep.subr.bf16.mxu0 0
        %2479 = vmatpush2.bf16.msra.mxu0 0
        %2480 = vmatprep.subr.bf16.mxu0 0
        %2481 = vmatpush2.bf16.msra.mxu0 0
        %2482 = vmatprep.subr.bf16.mxu0 0
        %2483 = vmatpush2.bf16.msra.mxu0 0
        %2484 = vmatprep.subr.bf16.mxu0 0
        %2485 = vmatpush2.bf16.msra.mxu0 0
        %2486 = vmatprep.subr.bf16.mxu0 0
        %2487 = vmatpush2.bf16.msra.mxu0 0
        %2488 = vmatprep.subr.bf16.mxu0 0
        %2489 = vmatpush2.bf16.msra.mxu0 0
        %2490 = vmatprep.mubr.bf16.mxu0 0
        %2491 = vmatmul.mubr.bf16.gmra.mxu0 %v2386
        %v2492 = vpop.f32.mrf.mxu0
        %v2493 = vadd.f32 0.0, %v2492
        %v2494 = vpop.f32.mrf.mxu0
        %v2495 = vpop.f32.mrf.mxu0
        %v2496 = vadd.f32 0.0, %v2495
        %v2497 = vpop.f32.mrf.mxu0
        %2498 = vmatprep.mubr.bf16.mxu0 0
        %2499 = vmatmul.mubr.bf16.gmra.mxu0 %v2387
        %v2500 = vpop.f32.mrf.mxu0
        %v2501 = vadd.f32 0.0, %v2500
        %v2502 = vpop.f32.mrf.mxu0
        %v2503 = vpop.f32.mrf.mxu0
        %v2504 = vadd.f32 0.0, %v2503
        %v2505 = vpop.f32.mrf.mxu0
        %2506 = vmatprep.mubr.bf16.mxu0 0
        %2507 = vmatmul.mubr.bf16.gmra.mxu0 %v2388
        %v2508 = vpop.f32.mrf.mxu0
        %v2509 = vadd.f32 0.0, %v2508
        %v2510 = vpop.f32.mrf.mxu0
        %v2511 = vpop.f32.mrf.mxu0
        %v2512 = vadd.f32 0.0, %v2511
        %v2513 = vpop.f32.mrf.mxu0
        %2514 = vmatprep.mubr.bf16.mxu0 0
        %2515 = vmatmul.mubr.bf16.gmra.mxu0 %v2389
        %v2516 = vpop.f32.mrf.mxu0
        %v2517 = vadd.f32 0.0, %v2516
        %v2518 = vpop.f32.mrf.mxu0
        %v2519 = vpop.f32.mrf.mxu0
        %v2520 = vadd.f32 0.0, %v2519
        %v2521 = vpop.f32.mrf.mxu0
        %2522 = vmatprep.mubr.bf16.mxu0 0
        %2523 = vmatmul.mubr.bf16.gmra.mxu0 %v2390
        %v2524 = vpop.f32.mrf.mxu0
        %v2525 = vadd.f32 0.0, %v2524
        %v2526 = vpop.f32.mrf.mxu0
        %v2527 = vpop.f32.mrf.mxu0
        %v2528 = vadd.f32 0.0, %v2527
        %v2529 = vpop.f32.mrf.mxu0
        %2530 = vmatprep.mubr.bf16.mxu0 0
        %2531 = vmatmul.mubr.bf16.gmra.mxu0 %v2391
        %v2532 = vpop.f32.mrf.mxu0
        %v2533 = vadd.f32 0.0, %v2532
        %v2534 = vpop.f32.mrf.mxu0
        %v2535 = vpop.f32.mrf.mxu0
        %v2536 = vadd.f32 0.0, %v2535
        %v2537 = vpop.f32.mrf.mxu0
        %2538 = vmatprep.mubr.bf16.mxu0 0
        %2539 = vmatmul.mubr.bf16.gmra.mxu0 %v2392
        %v2540 = vpop.f32.mrf.mxu0
        %v2541 = vadd.f32 0.0, %v2540
        %v2542 = vpop.f32.mrf.mxu0
        %v2543 = vpop.f32.mrf.mxu0
        %v2544 = vadd.f32 0.0, %v2543
        %v2545 = vpop.f32.mrf.mxu0
        %2546 = vmatprep.mubr.bf16.mxu0 0
        %2547 = vmatmul.mubr.bf16.gmra.mxu0 %v2393
        %v2548 = vpop.f32.mrf.mxu0
        %v2549 = vadd.f32 0.0, %v2548
        %v2550 = vpop.f32.mrf.mxu0
        %v2551 = vpop.f32.mrf.mxu0
        %v2552 = vadd.f32 0.0, %v2551
        %v2553 = vpop.f32.mrf.mxu0
        %2554 = vdwg.mxu0
        %v2555 = vld [vmem:[%s5] sm:$0x1]
        %v2557 = vlaneseq
        %v2558 = vshrl.u32 %v2557, 7
        %v2559 = vsub.s32 0, %v2558
        %v2560 = vrot.slane %v2555, %v2559
        %v2562 = vadd.f32 %v2493, %v2560
        %v2563 = vadd.f32 %v2496, %v2560
        %v2564 = vadd.f32 %v2501, %v2560
        %v2565 = vadd.f32 %v2504, %v2560
        %v2566 = vadd.f32 %v2509, %v2560
        %v2567 = vadd.f32 %v2512, %v2560
        %v2568 = vadd.f32 %v2517, %v2560
        %v2569 = vadd.f32 %v2520, %v2560
        %v2570 = vadd.f32 %v2525, %v2560
        %v2571 = vadd.f32 %v2528, %v2560
        %v2572 = vadd.f32 %v2533, %v2560
        %v2573 = vadd.f32 %v2536, %v2560
        %v2574 = vadd.f32 %v2541, %v2560
        %v2575 = vadd.f32 %v2544, %v2560
        %v2576 = vadd.f32 %v2549, %v2560
        %v2577 = vadd.f32 %v2552, %v2560
        %2578 = vst [vmem:[%s442] sm:$0xff] %v2562
        %2579 = vst [vmem:[%s442 + $0x8] sm:$0xff] %v2563
        %2580 = vst [vmem:[%s442 + $0x10] sm:$0xff] %v2564
        %2581 = vst [vmem:[%s442 + $0x18] sm:$0xff] %v2565
        %2582 = vst [vmem:[%s442 + $0x20] sm:$0xff] %v2566
        %2583 = vst [vmem:[%s442 + $0x28] sm:$0xff] %v2567
        %2584 = vst [vmem:[%s442 + $0x30] sm:$0xff] %v2568
        %2585 = vst [vmem:[%s442 + $0x38] sm:$0xff] %v2569
        %2586 = vst [vmem:[%s442 + $0x40] sm:$0xff] %v2570
        %2587 = vst [vmem:[%s442 + $0x48] sm:$0xff] %v2571
        %2588 = vst [vmem:[%s442 + $0x50] sm:$0xff] %v2572
        %2589 = vst [vmem:[%s442 + $0x58] sm:$0xff] %v2573
        %2590 = vst [vmem:[%s442 + $0x60] sm:$0xff] %v2574
        %2591 = vst [vmem:[%s442 + $0x68] sm:$0xff] %v2575
        %2592 = vst [vmem:[%s442 + $0x70] sm:$0xff] %v2576
        %2593 = vst [vmem:[%s442 + $0x78] sm:$0xff] %v2577
        %s2594 = smul.u32 16, %s17
        %p2595 = scmp.lt.s32.totalorder %s2594, 31
        %s2596 = scalar_select %p2595, %s2594, 31
        %s2597 = smul.addr %s2596, 8
        %s2598 = scalar_lea.vmem %s6, %s2597
        // Predicated region
        $region86: #{gcn_first_forward.1} parent=80 // pred_check
          %p2599 = pneg %p171
        $region87: #{gcn_first_forward.1} parent=80 // pred_check_branch
          %2601 = sbr.rel (%p2599) target = $region89
        $region88: #{gcn_first_forward.1} parent=80 // pred_region
          %s2602 = smul.u32 16, %s17
        $region89: #{gcn_first_forward.1} parent=80 // pred_fallthru
          _
      $region81: #{gcn_first_forward.1} parent=5 // pred_fallthru
        _
      %p2603 = scmp.le.s32.totalorder 2, %s12
      // Predicated region
      $region90: #{gcn_first_forward.1} parent=5 // pred_check
        %p2604 = pneg %p2603
      $region91: #{gcn_first_forward.1} parent=5 // pred_check_branch
        %2606 = sbr.rel (%p2604) target = $region93
      $region92: #{gcn_first_forward.1} parent=5 // pred_region
        %s2607 = ssub.s32 %s12, 2
        // Predicated region
        $region94: #{gcn_first_forward.1} parent=92 // pred_check
          %p2608 = pneg %p177
        $region95: #{gcn_first_forward.1} parent=92 // pred_check_branch
          %2610 = sbr.rel (%p2608) target = $region97
        $region96: #{gcn_first_forward.1} parent=92 // pred_region
          %s2611 = smul.u32 16, %s18
          %p2612 = scmp.lt.s32.totalorder %s2611, 31
          %s2613 = scalar_select %p2612, %s2611, 31
          %s2614 = smul.addr %s2613, 8
          %s2615 = scalar_lea.vmem %s6, %s2614
        $region97: #{gcn_first_forward.1} parent=92 // pred_fallthru
          _
      $region93: #{gcn_first_forward.1} parent=5 // pred_fallthru
        _
    $region6: #{gcn_first_forward.1} parent=1 // loop_footer
      %s16 = sadd.s32 1, %s12
    $region7: #{gcn_first_forward.1} parent=1 // loop_footer_branch
      %11 = sbr.rel target = $region3
    $region8: #{gcn_first_forward.1} parent=1 // loop_exit
      _

</llo_original>
